<compile_context>
chip_gen: v6e
topology: v6e:2x2x1
jax: 0.10.0
libtpu: 0.0.40
codegen_flags: <defaults>
</compile_context>

<pallas_src>
import jax
import jax.numpy as jnp
from jax.experimental import pallas as pl
from jax.experimental.pallas import tpu as pltpu

INPUT_DIMS = 4
FC1_DIMS = 1024
FC2_DIMS = 512
N_ACTIONS = 2


def _round_up(x, m):
    return ((x + m - 1) // m) * m


def _actor_kernel(x_ref, w1_ref, b1_ref, w2_ref, b2_ref, w3_ref, b3_ref, pi_ref):
    x = x_ref[...]                                           # (TM, 4) f32

    # fc1 + relu  (weights arrive as bf16 — HBM traffic halved — upcast in VMEM,
    # accumulate in f32 on the MXU)
    w1 = w1_ref[...].astype(jnp.float32)
    h1 = jnp.dot(x, w1, preferred_element_type=jnp.float32) + b1_ref[...]
    h1 = jnp.maximum(h1, 0.0)                                # (TM, 1024)

    # fc2 + relu
    w2 = w2_ref[...].astype(jnp.float32)
    h2 = jnp.dot(h1, w2, preferred_element_type=jnp.float32) + b2_ref[...]
    h2 = jnp.maximum(h2, 0.0)                                # (TM, 512)

    # pi head + softmax over actions (last dim)
    w3 = w3_ref[...].astype(jnp.float32)
    logits = jnp.dot(h2, w3, preferred_element_type=jnp.float32) + b3_ref[...]

    m = jnp.max(logits, axis=-1, keepdims=True)
    e = jnp.exp(logits - m)
    denom = jnp.sum(e, axis=-1, keepdims=True)
    pi_ref[...] = e * pl.reciprocal(denom, approx=False)


def example_actor_forward(state, params, *, block_b=256):
    """state: (B, 4) f32.  params: W1/W2/W3 (bf16 or f32), b1/b2/b3 (f32).
    Returns (B, 2) softmax probabilities (f32)."""
    state = jnp.asarray(state, jnp.float32)
    B = state.shape[0]

    # Weights fed as bf16 (halves HBM DMA); biases stay f32, shaped (1, out)
    # so the kernel sees lane-major broadcasts.
    w1 = jnp.asarray(params["W1"], jnp.bfloat16)
    w2 = jnp.asarray(params["W2"], jnp.bfloat16)
    w3 = jnp.asarray(params["W3"], jnp.bfloat16)
    b1 = jnp.asarray(params["b1"], jnp.float32).reshape(1, FC1_DIMS)
    b2 = jnp.asarray(params["b2"], jnp.float32).reshape(1, FC2_DIMS)
    b3 = jnp.asarray(params["b3"], jnp.float32).reshape(1, N_ACTIONS)

    # Batch tile: multiple of 8 (sublane), capped at block_b (keeps the f32
    # h1/h2 intermediates small and lets v7x megacore split the grid).
    tm = min(block_b, _round_up(B, 8))
    b_padded = _round_up(B, tm)
    if b_padded != B:
        state = jnp.pad(state, ((0, b_padded - B), (0, 0)))
    grid = (b_padded // tm,)

    # Weight / bias blocks ignore the batch index -> loaded once, VMEM-resident.
    def resident(shape):
        return pl.BlockSpec(shape, lambda i: (0, 0))

    flops = 2 * b_padded * (INPUT_DIMS * FC1_DIMS + FC1_DIMS * FC2_DIMS + FC2_DIMS * N_ACTIONS)
    bytes_accessed = (
        state.size * 4
        + (w1.size + w2.size + w3.size) * 2
        + (b1.size + b2.size + b3.size) * 4
        + b_padded * N_ACTIONS * 4
    )

    out = pl.pallas_call(
        _actor_kernel,
        out_shape=jax.ShapeDtypeStruct((b_padded, N_ACTIONS), jnp.float32),
        grid=grid,
        in_specs=[
            pl.BlockSpec((tm, INPUT_DIMS), lambda i: (i, 0)),
            resident((INPUT_DIMS, FC1_DIMS)),
            resident((1, FC1_DIMS)),
            resident((FC1_DIMS, FC2_DIMS)),
            resident((1, FC2_DIMS)),
            resident((FC2_DIMS, N_ACTIONS)),
            resident((1, N_ACTIONS)),
        ],
        out_specs=pl.BlockSpec((tm, N_ACTIONS), lambda i: (i, 0)),
        compiler_params=pltpu.CompilerParams(
            dimension_semantics=("parallel",),
            vmem_limit_bytes=16 << 20,   # resident footprint ~1 MiB bf16 weights + tiles; safe on v7x (64 MiB)
        ),
        cost_estimate=pl.CostEstimate(
            flops=flops,
            transcendentals=b_padded * N_ACTIONS,
            bytes_accessed=bytes_accessed,
        ),
    )(state, w1, b1, w2, b2, w3, b3)

    return out[:B]


def init_params(key):
    """Deterministic synthetic parameters (shapes match the torch module).
    Weights are stored directly in bf16 (inference layout); biases in f32."""
    ks = jax.random.split(key, 6)
    scale1 = 1.0 / jnp.sqrt(INPUT_DIMS)
    scale2 = 1.0 / jnp.sqrt(FC1_DIMS)
    scale3 = 1.0 / jnp.sqrt(FC2_DIMS)
    return {
        "W1": jax.random.uniform(ks[0], (INPUT_DIMS, FC1_DIMS), jnp.float32, -scale1, scale1).astype(jnp.bfloat16),
        "b1": jax.random.uniform(ks[1], (FC1_DIMS,), jnp.float32, -scale1, scale1),
        "W2": jax.random.uniform(ks[2], (FC1_DIMS, FC2_DIMS), jnp.float32, -scale2, scale2).astype(jnp.bfloat16),
        "b2": jax.random.uniform(ks[3], (FC2_DIMS,), jnp.float32, -scale2, scale2),
        "W3": jax.random.uniform(ks[4], (FC2_DIMS, N_ACTIONS), jnp.float32, -scale3, scale3).astype(jnp.bfloat16),
        "b3": jax.random.uniform(ks[5], (N_ACTIONS,), jnp.float32, -scale3, scale3),
    }


def _reference(state, params):
    """Pure-JAX reference using the same bf16-rounded weights, f32 math."""
    hp = jax.lax.Precision.HIGHEST
    w1 = params["W1"].astype(jnp.float32)
    w2 = params["W2"].astype(jnp.float32)
    w3 = params["W3"].astype(jnp.float32)
    h1 = jnp.maximum(jnp.dot(state, w1, precision=hp) + params["b1"], 0.0)
    h2 = jnp.maximum(jnp.dot(h1, w2, precision=hp) + params["b2"], 0.0)
    logits = jnp.dot(h2, w3, precision=hp) + params["b3"]
    return jax.nn.softmax(logits, axis=-1)


def _check(batch, params, key, block_b=256):
    state = jax.random.normal(key, (batch, INPUT_DIMS), dtype=jnp.float32)
    pi = jax.block_until_ready(example_actor_forward(state, params, block_b=block_b))
    ref = _reference(state, params)
    assert pi.shape == (batch, N_ACTIONS)
    assert jnp.allclose(jnp.sum(pi, axis=-1), 1.0, atol=1e-5)
    # Tolerance accounts for bf16 weight storage / TPU matmul precision differences.
    assert jnp.allclose(pi, ref, atol=5e-3, rtol=5e-3)


if __name__ == "__main__":
    key = jax.random.PRNGKey(0)
    pkey, xkey1, xkey2 = jax.random.split(key, 3)
    params = init_params(pkey)

    # Small RL-style batch (single grid step, no padding).
    _check(8, params, xkey1)

    # Larger, non-multiple batch: exercises batch padding + multi-step grid
    # with VMEM-resident weights.
    _check(300, params, xkey2)

    # TODO(synk): torch-side Adam optimizer / checkpoint save+load are training/IO
    # concerns with no Pallas-forward equivalent; only the forward pass is implemented.
    print("KERNEL_OK")
</pallas_src>

<mosaic_0001>
module attributes {stable_mosaic.version = 11 : i64} {
  func.func @_actor_kernel(%arg0: i32, %arg1: memref<8x4xf32, #tpu.memory_space<vmem>>, %arg2: memref<4x1024xbf16, #tpu.memory_space<vmem>>, %arg3: memref<1x1024xf32, #tpu.memory_space<vmem>>, %arg4: memref<1024x512xbf16, #tpu.memory_space<vmem>>, %arg5: memref<1x512xf32, #tpu.memory_space<vmem>>, %arg6: memref<512x2xbf16, #tpu.memory_space<vmem>>, %arg7: memref<1x2xf32, #tpu.memory_space<vmem>>, %arg8: memref<8x2xf32, #tpu.memory_space<vmem>>) attributes {dimension_semantics = [#tpu.dimension_semantics<parallel>], iteration_bounds = array<i64: 1>, scalar_prefetch = 0 : i64, scratch_operands = 0 : i64, tpu.core_type = #tpu.core_type<tc>, window_params = [{transform_indices = @transform_0, window_bounds = array<i64: 8, 4>}, {pipeline_mode = #tpu.pipeline_mode<synchronous>, transform_indices = @transform_1, window_bounds = array<i64: 4, 1024>}, {pipeline_mode = #tpu.pipeline_mode<synchronous>, transform_indices = @transform_2, window_bounds = array<i64: 1, 1024>}, {pipeline_mode = #tpu.pipeline_mode<synchronous>, transform_indices = @transform_3, window_bounds = array<i64: 1024, 512>}, {pipeline_mode = #tpu.pipeline_mode<synchronous>, transform_indices = @transform_4, window_bounds = array<i64: 1, 512>}, {pipeline_mode = #tpu.pipeline_mode<synchronous>, transform_indices = @transform_5, window_bounds = array<i64: 512, 2>}, {pipeline_mode = #tpu.pipeline_mode<synchronous>, transform_indices = @transform_6, window_bounds = array<i64: 1, 2>}, {transform_indices = @transform_7, window_bounds = array<i64: 8, 2>}]} {
    %c0 = arith.constant 0 : index
    %c0_0 = arith.constant 0 : index
    %0 = vector.load %arg1[%c0, %c0_0] : memref<8x4xf32, #tpu.memory_space<vmem>>, vector<8x4xf32>
    %c0_1 = arith.constant 0 : index
    %c0_2 = arith.constant 0 : index
    %1 = vector.load %arg2[%c0_1, %c0_2] : memref<4x1024xbf16, #tpu.memory_space<vmem>>, vector<4x1024xbf16>
    %2 = arith.extf %1 : vector<4x1024xbf16> to vector<4x1024xf32>
    %cst = arith.constant dense<0.000000e+00> : vector<8x1024xf32>
    %3 = tpu.matmul %0, %2, %cst {dimension_numbers = #tpu.dot_dimension_numbers<[1], [0], [0], [1], [0, 0, 1, 1], [], []>} : vector<8x4xf32>, vector<4x1024xf32>, vector<8x1024xf32> -> vector<8x1024xf32>
    %c0_3 = arith.constant 0 : index
    %c0_4 = arith.constant 0 : index
    %4 = vector.load %arg3[%c0_3, %c0_4] : memref<1x1024xf32, #tpu.memory_space<vmem>>, vector<1x1024xf32>
    %5 = vector.broadcast %4 : vector<1x1024xf32> to vector<8x1024xf32>
    %6 = arith.addf %3, %5 : vector<8x1024xf32>
    %cst_5 = arith.constant 0.000000e+00 : f32
    %7 = vector.broadcast %cst_5 : f32 to vector<8x1024xf32>
    %8 = arith.maximumf %6, %7 : vector<8x1024xf32>
    %c0_6 = arith.constant 0 : index
    %c0_7 = arith.constant 0 : index
    %9 = vector.load %arg4[%c0_6, %c0_7] : memref<1024x512xbf16, #tpu.memory_space<vmem>>, vector<1024x512xbf16>
    %10 = arith.extf %9 : vector<1024x512xbf16> to vector<1024x512xf32>
    %cst_8 = arith.constant dense<0.000000e+00> : vector<8x512xf32>
    %11 = tpu.matmul %8, %10, %cst_8 {dimension_numbers = #tpu.dot_dimension_numbers<[1], [0], [0], [1], [0, 0, 1, 1], [], []>} : vector<8x1024xf32>, vector<1024x512xf32>, vector<8x512xf32> -> vector<8x512xf32>
    %c0_9 = arith.constant 0 : index
    %c0_10 = arith.constant 0 : index
    %12 = vector.load %arg5[%c0_9, %c0_10] : memref<1x512xf32, #tpu.memory_space<vmem>>, vector<1x512xf32>
    %13 = vector.broadcast %12 : vector<1x512xf32> to vector<8x512xf32>
    %14 = arith.addf %11, %13 : vector<8x512xf32>
    %cst_11 = arith.constant 0.000000e+00 : f32
    %15 = vector.broadcast %cst_11 : f32 to vector<8x512xf32>
    %16 = arith.maximumf %14, %15 : vector<8x512xf32>
    %c0_12 = arith.constant 0 : index
    %c0_13 = arith.constant 0 : index
    %17 = vector.load %arg6[%c0_12, %c0_13] : memref<512x2xbf16, #tpu.memory_space<vmem>>, vector<512x2xbf16>
    %18 = arith.extf %17 : vector<512x2xbf16> to vector<512x2xf32>
    %cst_14 = arith.constant dense<0.000000e+00> : vector<8x2xf32>
    %19 = tpu.matmul %16, %18, %cst_14 {dimension_numbers = #tpu.dot_dimension_numbers<[1], [0], [0], [1], [0, 0, 1, 1], [], []>} : vector<8x512xf32>, vector<512x2xf32>, vector<8x2xf32> -> vector<8x2xf32>
    %c0_15 = arith.constant 0 : index
    %c0_16 = arith.constant 0 : index
    %20 = vector.load %arg7[%c0_15, %c0_16] : memref<1x2xf32, #tpu.memory_space<vmem>>, vector<1x2xf32>
    %21 = vector.broadcast %20 : vector<1x2xf32> to vector<8x2xf32>
    %22 = arith.addf %19, %21 : vector<8x2xf32>
    %cst_17 = arith.constant dense<0xFF800000> : vector<8xf32>
    %23 = vector.multi_reduction <maximumf>, %22, %cst_17 [1] : vector<8x2xf32> to vector<8xf32>
    %24 = vector.shape_cast %23 : vector<8xf32> to vector<8x1xf32>
    %25 = vector.broadcast %24 : vector<8x1xf32> to vector<8x2xf32>
    %26 = arith.subf %22, %25 : vector<8x2xf32>
    %27 = math.exp %26 : vector<8x2xf32>
    %cst_18 = arith.constant dense<0.000000e+00> : vector<8xf32>
    %28 = vector.multi_reduction <add>, %27, %cst_18 [1] : vector<8x2xf32> to vector<8xf32>
    %29 = vector.shape_cast %28 : vector<8xf32> to vector<8x1xf32>
    %30 = tpu.reciprocal %29 : vector<8x1xf32> -> vector<8x1xf32>
    %31 = vector.broadcast %30 : vector<8x1xf32> to vector<8x2xf32>
    %32 = arith.mulf %27, %31 : vector<8x2xf32>
    %c0_19 = arith.constant 0 : index
    %c0_20 = arith.constant 0 : index
    %33 = vector.load %arg8[%c0_19, %c0_20] : memref<8x2xf32, #tpu.memory_space<vmem>>, vector<8x2xf32>
    tpu.vector_store %arg8[%c0_19, %c0_20], %32 {strides = array<i32>} : memref<8x2xf32, #tpu.memory_space<vmem>>, vector<8x2xf32>,
    return
  }
  func.func @transform_0(%arg0: i32) -> (i32, i32) {
    %c0_i32 = arith.constant 0 : i32
    %c0_i32_0 = arith.constant 0 : i32
    return %arg0, %c0_i32 : i32, i32
  }
  func.func @transform_1(%arg0: i32) -> (i32, i32) {
    %c0_i32 = arith.constant 0 : i32
    %c0_i32_0 = arith.constant 0 : i32
    %c0_i32_1 = arith.constant 0 : i32
    return %c0_i32, %c0_i32_0 : i32, i32
  }
  func.func @transform_2(%arg0: i32) -> (i32, i32) {
    %c0_i32 = arith.constant 0 : i32
    %c0_i32_0 = arith.constant 0 : i32
    %c0_i32_1 = arith.constant 0 : i32
    return %c0_i32, %c0_i32_0 : i32, i32
  }
  func.func @transform_3(%arg0: i32) -> (i32, i32) {
    %c0_i32 = arith.constant 0 : i32
    %c0_i32_0 = arith.constant 0 : i32
    %c0_i32_1 = arith.constant 0 : i32
    return %c0_i32, %c0_i32_0 : i32, i32
  }
  func.func @transform_4(%arg0: i32) -> (i32, i32) {
    %c0_i32 = arith.constant 0 : i32
    %c0_i32_0 = arith.constant 0 : i32
    %c0_i32_1 = arith.constant 0 : i32
    return %c0_i32, %c0_i32_0 : i32, i32
  }
  func.func @transform_5(%arg0: i32) -> (i32, i32) {
    %c0_i32 = arith.constant 0 : i32
    %c0_i32_0 = arith.constant 0 : i32
    %c0_i32_1 = arith.constant 0 : i32
    return %c0_i32, %c0_i32_0 : i32, i32
  }
  func.func @transform_6(%arg0: i32) -> (i32, i32) {
    %c0_i32 = arith.constant 0 : i32
    %c0_i32_0 = arith.constant 0 : i32
    %c0_i32_1 = arith.constant 0 : i32
    return %c0_i32, %c0_i32_0 : i32, i32
  }
  func.func @transform_7(%arg0: i32) -> (i32, i32) {
    %c0_i32 = arith.constant 0 : i32
    %c0_i32_0 = arith.constant 0 : i32
    return %arg0, %c0_i32 : i32, i32
  }
}

</mosaic_0001>

<llo_original>
// kernel: tpu_custom_call.1
$region0: #{tpu_custom_call.1}
  #allocation0 [shape = 'u32[]', space=smem, size = 0x4, offset = 0x4, fixed_abs, tag = 'smem constant byte address 0x4 - core index']
  #allocation1 [shape = 'u32[144,128]{1,0:T(1,128)}', space=vmem, size = 0x12000, scoped, tag = 'internal scratch']
  %s0 = inlined_call_operand.vmem [shape: f32[8,4], index: 0, kind: input, shape index: {}]
  %s1 = inlined_call_operand.vmem [shape: bf16[4,1024], index: 1, kind: input, shape index: {}]
  %s2 = inlined_call_operand.vmem [shape: f32[1,1024], index: 2, kind: input, shape index: {}]
  %s3 = inlined_call_operand.hbm [shape: bf16[1024,512], index: 3, kind: input, shape index: {}]
  %s4 = inlined_call_operand.vmem [shape: f32[1,512], index: 4, kind: input, shape index: {}]
  %s5 = inlined_call_operand.vmem [shape: bf16[512,2], index: 5, kind: input, shape index: {}]
  %s6 = inlined_call_operand.vmem [shape: f32[1,2], index: 6, kind: input, shape index: {}]
  %s7 = inlined_call_operand.vmem [shape: f32[8,2], index: 7, kind: output, shape index: {}]
  %s8 = sld [smem:[#allocation0]]
  $region42: #{tpu_custom_call.1} parent=0
    _
  %s10 = ssub.s32 1, %s8
  %s11 = scalar_select 0, %s10, %s8
  $region1: #{tpu_custom_call.1} parent=0
    #allocation2 [shape = 'u8[1048576]{0}', space=vmem, size = 0x100000, scoped, tag = 'input window, operand 3, single buffered']
    #allocation3 [shape = 's32[1]{0}', space=sflag, size = 0x4, scoped, tag = 'scoped memory for tpu_custom_call.1']
    %12 = vsyncpa [#allocation3], 0
    // Predicated region
    $region2: #{tpu_custom_call.1} parent=1 // pred_check
      _
    $region3: #{tpu_custom_call.1} parent=1 // pred_check_branch
      %14 = sbr.rel (0) target = $region5
    $region4: #{tpu_custom_call.1} parent=1 // pred_region
      _
    $region5: #{tpu_custom_call.1} parent=1 // pred_fallthru
      _
    // Predicated region
    $region6: #{tpu_custom_call.1} parent=1 // pred_check
      _
    $region7: #{tpu_custom_call.1} parent=1 // pred_check_branch
      %16 = sbr.rel (0) target = $region9
    $region8: #{tpu_custom_call.1} parent=1 // pred_region
      _
    $region9: #{tpu_custom_call.1} parent=1 // pred_fallthru
      _
    // Predicated region
    $region10: #{tpu_custom_call.1} parent=1 // pred_check
      _
    $region11: #{tpu_custom_call.1} parent=1 // pred_check_branch
      %18 = sbr.rel (0) target = $region13
    $region12: #{tpu_custom_call.1} parent=1 // pred_region
      _
    $region13: #{tpu_custom_call.1} parent=1 // pred_fallthru
      _
    // Predicated region
    $region14: #{tpu_custom_call.1} parent=1 // pred_check
      _
    $region15: #{tpu_custom_call.1} parent=1 // pred_check_branch
      %20 = sbr.rel (0) target = $region17
    $region16: #{tpu_custom_call.1} parent=1 // pred_region
      %s22 = ssub.s32 32768, 32768
      %23 = vsyncadd [#allocation3], %s22
      %s24 = sshll.u32 [#allocation2], 4
      %s25 = int_to_ptr.vmem [resolvable:$true] %s24
      %30 = dma.hbm_to_vmem [thread:$0]  %s3, 32768, %s25, [#allocation3], 256, 256, 16
    $region17: #{tpu_custom_call.1} parent=1 // pred_fallthru
      _
    // Predicated region
    $region18: #{tpu_custom_call.1} parent=1 // pred_check
      _
    $region19: #{tpu_custom_call.1} parent=1 // pred_check_branch
      %32 = sbr.rel (0) target = $region21
    $region20: #{tpu_custom_call.1} parent=1 // pred_region
      _
    $region21: #{tpu_custom_call.1} parent=1 // pred_fallthru
      _
    // Predicated region
    $region22: #{tpu_custom_call.1} parent=1 // pred_check
      _
    $region23: #{tpu_custom_call.1} parent=1 // pred_check_branch
      %34 = sbr.rel (0) target = $region25
    $region24: #{tpu_custom_call.1} parent=1 // pred_region
      _
    $region25: #{tpu_custom_call.1} parent=1 // pred_fallthru
      _
    // Predicated region
    $region26: #{tpu_custom_call.1} parent=1 // pred_check
      _
    $region27: #{tpu_custom_call.1} parent=1 // pred_check_branch
      %36 = sbr.rel (0) target = $region29
    $region28: #{tpu_custom_call.1} parent=1 // pred_region
      _
    $region29: #{tpu_custom_call.1} parent=1 // pred_fallthru
      _
    // Predicated region
    $region30: #{tpu_custom_call.1} parent=1 // pred_check
      _
    $region31: #{tpu_custom_call.1} parent=1 // pred_check_branch
      %38 = sbr.rel (0) target = $region33
    $region32: #{tpu_custom_call.1} parent=1 // pred_region
      %39 = dma.done [#allocation3], 32768
    $region33: #{tpu_custom_call.1} parent=1 // pred_fallthru
      _
    %v40 = vld [vmem:[%s0] sm:$0xff]
    %v41 = vld [vmem:[%s1] sm:$0xff]
    %v42 = vld [vmem:[%s1 + $0x8] sm:$0xff]
    %v43 = vunpack.c.l.bf16 %v41
    %v44 = vunpack.c.h.bf16 %v41
    %v45 = vunpack.c.l.bf16 %v42
    %v46 = vunpack.c.h.bf16 %v42
    %v47 = vld [vmem:[%s2] sm:$0xff]
    %v49 = vlaneseq
    %v50 = vshrl.u32 %v49, 7
    %v51 = vsub.s32 0, %v50
    %v52 = vrot.slane %v47, %v51
    %v53 = vlaneseq
    %v54 = vshrl.u32 %v53, 7
    %v55 = vsub.s32 1, %v54
    %v56 = vrot.slane %v47, %v55
    %v57 = vlaneseq
    %v58 = vshrl.u32 %v57, 7
    %v59 = vsub.s32 2, %v58
    %v60 = vrot.slane %v47, %v59
    %v61 = vlaneseq
    %v62 = vshrl.u32 %v61, 7
    %v63 = vsub.s32 3, %v62
    %v64 = vrot.slane %v47, %v63
    %v65 = vlaneseq
    %v66 = vshrl.u32 %v65, 7
    %v67 = vsub.s32 4, %v66
    %v68 = vrot.slane %v47, %v67
    %v69 = vlaneseq
    %v70 = vshrl.u32 %v69, 7
    %v71 = vsub.s32 5, %v70
    %v72 = vrot.slane %v47, %v71
    %v73 = vlaneseq
    %v74 = vshrl.u32 %v73, 7
    %v75 = vsub.s32 6, %v74
    %v76 = vrot.slane %v47, %v75
    %v77 = vlaneseq
    %v78 = vshrl.u32 %v77, 7
    %v79 = vsub.s32 7, %v78
    %v80 = vrot.slane %v47, %v79
    %v93 = vcombine.high %v43, %v43
    %v94 = vcombine.high %v44, %v44
    %v95 = vcombine.high %v45, %v45
    %v96 = vcombine.high %v46, %v46
    %vm97 = vcmask 31744
    %v99 = vsel %vm97, %v40, 0
    %vm101 = vcmask 1043456
    %v102 = vsel %vm101, %v43, 0
    %v104 = vsel %vm101, %v93, 0
    %v106 = vsel %vm101, %v44, 0
    %v108 = vsel %vm101, %v94, 0
    %v110 = vsel %vm101, %v45, 0
    %v112 = vsel %vm101, %v95, 0
    %v114 = vsel %vm101, %v46, 0
    %v116 = vsel %vm101, %v96, 0
    %118 = vmatprep.subr.mxu0 0.0
    %119 = vmatpush1.msra.mxu0 0.0
    %120 = vmatprep.subr.mxu0 0.0
    %121 = vmatpush1.msra.mxu0 0.0
    %122 = vmatprep.subr.mxu0 0.0
    %123 = vmatpush1.msra.mxu0 0.0
    %124 = vmatprep.subr.mxu0 0.0
    %125 = vmatpush1.msra.mxu0 0.0
    %126 = vmatprep.subr.mxu0 0.0
    %127 = vmatpush1.msra.mxu0 0.0
    %128 = vmatprep.subr.mxu0 0.0
    %129 = vmatpush1.msra.mxu0 0.0
    %130 = vmatprep.subr.mxu0 0.0
    %131 = vmatpush1.msra.mxu0 0.0
    %132 = vmatprep.subr.mxu0 0.0
    %133 = vmatpush1.msra.mxu0 0.0
    %134 = vmatprep.subr.mxu0 0.0
    %135 = vmatpush1.msra.mxu0 0.0
    %136 = vmatprep.subr.mxu0 0.0
    %137 = vmatpush1.msra.mxu0 0.0
    %138 = vmatprep.subr.mxu0 0.0
    %139 = vmatpush1.msra.mxu0 0.0
    %140 = vmatprep.subr.mxu0 0.0
    %141 = vmatpush1.msra.mxu0 0.0
    %142 = vmatprep.subr.mxu0 0.0
    %143 = vmatpush1.msra.mxu0 0.0
    %144 = vmatprep.subr.mxu0 0.0
    %145 = vmatpush1.msra.mxu0 0.0
    %146 = vmatprep.subr.mxu0 0.0
    %147 = vmatpush1.msra.mxu0 0.0
    %148 = vmatprep.subr.mxu0 %v104
    %149 = vmatpush1.msra.mxu0 %v102
    %150 = vmatprep.subr.mxu0 0.0
    %151 = vmatpush2.msra.mxu0 0.0
    %152 = vmatprep.subr.mxu0 0.0
    %153 = vmatpush2.msra.mxu0 0.0
    %154 = vmatprep.subr.mxu0 0.0
    %155 = vmatpush2.msra.mxu0 0.0
    %156 = vmatprep.subr.mxu0 0.0
    %157 = vmatpush2.msra.mxu0 0.0
    %158 = vmatprep.subr.mxu0 0.0
    %159 = vmatpush2.msra.mxu0 0.0
    %160 = vmatprep.subr.mxu0 0.0
    %161 = vmatpush2.msra.mxu0 0.0
    %162 = vmatprep.subr.mxu0 0.0
    %163 = vmatpush2.msra.mxu0 0.0
    %164 = vmatprep.subr.mxu0 0.0
    %165 = vmatpush2.msra.mxu0 0.0
    %166 = vmatprep.subr.mxu0 0.0
    %167 = vmatpush2.msra.mxu0 0.0
    %168 = vmatprep.subr.mxu0 0.0
    %169 = vmatpush2.msra.mxu0 0.0
    %170 = vmatprep.subr.mxu0 0.0
    %171 = vmatpush2.msra.mxu0 0.0
    %172 = vmatprep.subr.mxu0 0.0
    %173 = vmatpush2.msra.mxu0 0.0
    %174 = vmatprep.subr.mxu0 0.0
    %175 = vmatpush2.msra.mxu0 0.0
    %176 = vmatprep.subr.mxu0 0.0
    %177 = vmatpush2.msra.mxu0 0.0
    %178 = vmatprep.subr.mxu0 0.0
    %179 = vmatpush2.msra.mxu0 0.0
    %180 = vmatprep.subr.mxu0 0.0
    %181 = vmatpush2.msra.mxu0 0.0
    %182 = vmatprep.mubr.f32.mxu0 0.0
    %183 = vmatmul.mubr.f32.gmra.mxu0 %v99
    %v184 = vpop.f32.mrf.mxu0
    %v185 = vadd.f32 %v52, %v184
    %v186 = vpop.f32.mrf.mxu0
    %v187 = vadd.f32 %v56, %v186
    %188 = vdwg.mxu0
    %189 = vmatprep.subr.mxu0 0.0
    %190 = vmatpush1.msra.mxu0 0.0
    %191 = vmatprep.subr.mxu0 0.0
    %192 = vmatpush1.msra.mxu0 0.0
    %193 = vmatprep.subr.mxu0 0.0
    %194 = vmatpush1.msra.mxu0 0.0
    %195 = vmatprep.subr.mxu0 0.0
    %196 = vmatpush1.msra.mxu0 0.0
    %197 = vmatprep.subr.mxu0 0.0
    %198 = vmatpush1.msra.mxu0 0.0
    %199 = vmatprep.subr.mxu0 0.0
    %200 = vmatpush1.msra.mxu0 0.0
    %201 = vmatprep.subr.mxu0 0.0
    %202 = vmatpush1.msra.mxu0 0.0
    %203 = vmatprep.subr.mxu0 0.0
    %204 = vmatpush1.msra.mxu0 0.0
    %205 = vmatprep.subr.mxu0 0.0
    %206 = vmatpush1.msra.mxu0 0.0
    %207 = vmatprep.subr.mxu0 0.0
    %208 = vmatpush1.msra.mxu0 0.0
    %209 = vmatprep.subr.mxu0 0.0
    %210 = vmatpush1.msra.mxu0 0.0
    %211 = vmatprep.subr.mxu0 0.0
    %212 = vmatpush1.msra.mxu0 0.0
    %213 = vmatprep.subr.mxu0 0.0
    %214 = vmatpush1.msra.mxu0 0.0
    %215 = vmatprep.subr.mxu0 0.0
    %216 = vmatpush1.msra.mxu0 0.0
    %217 = vmatprep.subr.mxu0 0.0
    %218 = vmatpush1.msra.mxu0 0.0
    %219 = vmatprep.subr.mxu0 %v108
    %220 = vmatpush1.msra.mxu0 %v106
    %221 = vmatprep.subr.mxu0 0.0
    %222 = vmatpush2.msra.mxu0 0.0
    %223 = vmatprep.subr.mxu0 0.0
    %224 = vmatpush2.msra.mxu0 0.0
    %225 = vmatprep.subr.mxu0 0.0
    %226 = vmatpush2.msra.mxu0 0.0
    %227 = vmatprep.subr.mxu0 0.0
    %228 = vmatpush2.msra.mxu0 0.0
    %229 = vmatprep.subr.mxu0 0.0
    %230 = vmatpush2.msra.mxu0 0.0
    %231 = vmatprep.subr.mxu0 0.0
    %232 = vmatpush2.msra.mxu0 0.0
    %233 = vmatprep.subr.mxu0 0.0
    %234 = vmatpush2.msra.mxu0 0.0
    %235 = vmatprep.subr.mxu0 0.0
    %236 = vmatpush2.msra.mxu0 0.0
    %237 = vmatprep.subr.mxu0 0.0
    %238 = vmatpush2.msra.mxu0 0.0
    %239 = vmatprep.subr.mxu0 0.0
    %240 = vmatpush2.msra.mxu0 0.0
    %241 = vmatprep.subr.mxu0 0.0
    %242 = vmatpush2.msra.mxu0 0.0
    %243 = vmatprep.subr.mxu0 0.0
    %244 = vmatpush2.msra.mxu0 0.0
    %245 = vmatprep.subr.mxu0 0.0
    %246 = vmatpush2.msra.mxu0 0.0
    %247 = vmatprep.subr.mxu0 0.0
    %248 = vmatpush2.msra.mxu0 0.0
    %249 = vmatprep.subr.mxu0 0.0
    %250 = vmatpush2.msra.mxu0 0.0
    %251 = vmatprep.subr.mxu0 0.0
    %252 = vmatpush2.msra.mxu0 0.0
    %253 = vmatprep.mubr.f32.mxu0 0.0
    %254 = vmatmul.mubr.f32.gmra.mxu0 %v99
    %v255 = vpop.f32.mrf.mxu0
    %v256 = vadd.f32 %v60, %v255
    %v257 = vpop.f32.mrf.mxu0
    %v258 = vadd.f32 %v64, %v257
    %259 = vdwg.mxu0
    %260 = vmatprep.subr.mxu0 0.0
    %261 = vmatpush1.msra.mxu0 0.0
    %262 = vmatprep.subr.mxu0 0.0
    %263 = vmatpush1.msra.mxu0 0.0
    %264 = vmatprep.subr.mxu0 0.0
    %265 = vmatpush1.msra.mxu0 0.0
    %266 = vmatprep.subr.mxu0 0.0
    %267 = vmatpush1.msra.mxu0 0.0
    %268 = vmatprep.subr.mxu0 0.0
    %269 = vmatpush1.msra.mxu0 0.0
    %270 = vmatprep.subr.mxu0 0.0
    %271 = vmatpush1.msra.mxu0 0.0
    %272 = vmatprep.subr.mxu0 0.0
    %273 = vmatpush1.msra.mxu0 0.0
    %274 = vmatprep.subr.mxu0 0.0
    %275 = vmatpush1.msra.mxu0 0.0
    %276 = vmatprep.subr.mxu0 0.0
    %277 = vmatpush1.msra.mxu0 0.0
    %278 = vmatprep.subr.mxu0 0.0
    %279 = vmatpush1.msra.mxu0 0.0
    %280 = vmatprep.subr.mxu0 0.0
    %281 = vmatpush1.msra.mxu0 0.0
    %282 = vmatprep.subr.mxu0 0.0
    %283 = vmatpush1.msra.mxu0 0.0
    %284 = vmatprep.subr.mxu0 0.0
    %285 = vmatpush1.msra.mxu0 0.0
    %286 = vmatprep.subr.mxu0 0.0
    %287 = vmatpush1.msra.mxu0 0.0
    %288 = vmatprep.subr.mxu0 0.0
    %289 = vmatpush1.msra.mxu0 0.0
    %290 = vmatprep.subr.mxu0 %v112
    %291 = vmatpush1.msra.mxu0 %v110
    %292 = vmatprep.subr.mxu0 0.0
    %293 = vmatpush2.msra.mxu0 0.0
    %294 = vmatprep.subr.mxu0 0.0
    %295 = vmatpush2.msra.mxu0 0.0
    %296 = vmatprep.subr.mxu0 0.0
    %297 = vmatpush2.msra.mxu0 0.0
    %298 = vmatprep.subr.mxu0 0.0
    %299 = vmatpush2.msra.mxu0 0.0
    %300 = vmatprep.subr.mxu0 0.0
    %301 = vmatpush2.msra.mxu0 0.0
    %302 = vmatprep.subr.mxu0 0.0
    %303 = vmatpush2.msra.mxu0 0.0
    %304 = vmatprep.subr.mxu0 0.0
    %305 = vmatpush2.msra.mxu0 0.0
    %306 = vmatprep.subr.mxu0 0.0
    %307 = vmatpush2.msra.mxu0 0.0
    %308 = vmatprep.subr.mxu0 0.0
    %309 = vmatpush2.msra.mxu0 0.0
    %310 = vmatprep.subr.mxu0 0.0
    %311 = vmatpush2.msra.mxu0 0.0
    %312 = vmatprep.subr.mxu0 0.0
    %313 = vmatpush2.msra.mxu0 0.0
    %314 = vmatprep.subr.mxu0 0.0
    %315 = vmatpush2.msra.mxu0 0.0
    %316 = vmatprep.subr.mxu0 0.0
    %317 = vmatpush2.msra.mxu0 0.0
    %318 = vmatprep.subr.mxu0 0.0
    %319 = vmatpush2.msra.mxu0 0.0
    %320 = vmatprep.subr.mxu0 0.0
    %321 = vmatpush2.msra.mxu0 0.0
    %322 = vmatprep.subr.mxu0 0.0
    %323 = vmatpush2.msra.mxu0 0.0
    %324 = vmatprep.mubr.f32.mxu0 0.0
    %325 = vmatmul.mubr.f32.gmra.mxu0 %v99
    %v326 = vpop.f32.mrf.mxu0
    %v327 = vadd.f32 %v68, %v326
    %v328 = vpop.f32.mrf.mxu0
    %v329 = vadd.f32 %v72, %v328
    %330 = vdwg.mxu0
    %331 = vmatprep.subr.mxu0 0.0
    %332 = vmatpush1.msra.mxu0 0.0
    %333 = vmatprep.subr.mxu0 0.0
    %334 = vmatpush1.msra.mxu0 0.0
    %335 = vmatprep.subr.mxu0 0.0
    %336 = vmatpush1.msra.mxu0 0.0
    %337 = vmatprep.subr.mxu0 0.0
    %338 = vmatpush1.msra.mxu0 0.0
    %339 = vmatprep.subr.mxu0 0.0
    %340 = vmatpush1.msra.mxu0 0.0
    %341 = vmatprep.subr.mxu0 0.0
    %342 = vmatpush1.msra.mxu0 0.0
    %343 = vmatprep.subr.mxu0 0.0
    %344 = vmatpush1.msra.mxu0 0.0
    %345 = vmatprep.subr.mxu0 0.0
    %346 = vmatpush1.msra.mxu0 0.0
    %347 = vmatprep.subr.mxu0 0.0
    %348 = vmatpush1.msra.mxu0 0.0
    %349 = vmatprep.subr.mxu0 0.0
    %350 = vmatpush1.msra.mxu0 0.0
    %351 = vmatprep.subr.mxu0 0.0
    %352 = vmatpush1.msra.mxu0 0.0
    %353 = vmatprep.subr.mxu0 0.0
    %354 = vmatpush1.msra.mxu0 0.0
    %355 = vmatprep.subr.mxu0 0.0
    %356 = vmatpush1.msra.mxu0 0.0
    %357 = vmatprep.subr.mxu0 0.0
    %358 = vmatpush1.msra.mxu0 0.0
    %359 = vmatprep.subr.mxu0 0.0
    %360 = vmatpush1.msra.mxu0 0.0
    %361 = vmatprep.subr.mxu0 %v116
    %362 = vmatpush1.msra.mxu0 %v114
    %363 = vmatprep.subr.mxu0 0.0
    %364 = vmatpush2.msra.mxu0 0.0
    %365 = vmatprep.subr.mxu0 0.0
    %366 = vmatpush2.msra.mxu0 0.0
    %367 = vmatprep.subr.mxu0 0.0
    %368 = vmatpush2.msra.mxu0 0.0
    %369 = vmatprep.subr.mxu0 0.0
    %370 = vmatpush2.msra.mxu0 0.0
    %371 = vmatprep.subr.mxu0 0.0
    %372 = vmatpush2.msra.mxu0 0.0
    %373 = vmatprep.subr.mxu0 0.0
    %374 = vmatpush2.msra.mxu0 0.0
    %375 = vmatprep.subr.mxu0 0.0
    %376 = vmatpush2.msra.mxu0 0.0
    %377 = vmatprep.subr.mxu0 0.0
    %378 = vmatpush2.msra.mxu0 0.0
    %379 = vmatprep.subr.mxu0 0.0
    %380 = vmatpush2.msra.mxu0 0.0
    %381 = vmatprep.subr.mxu0 0.0
    %382 = vmatpush2.msra.mxu0 0.0
    %383 = vmatprep.subr.mxu0 0.0
    %384 = vmatpush2.msra.mxu0 0.0
    %385 = vmatprep.subr.mxu0 0.0
    %386 = vmatpush2.msra.mxu0 0.0
    %387 = vmatprep.subr.mxu0 0.0
    %388 = vmatpush2.msra.mxu0 0.0
    %389 = vmatprep.subr.mxu0 0.0
    %390 = vmatpush2.msra.mxu0 0.0
    %391 = vmatprep.subr.mxu0 0.0
    %392 = vmatpush2.msra.mxu0 0.0
    %393 = vmatprep.subr.mxu0 0.0
    %394 = vmatpush2.msra.mxu0 0.0
    %395 = vmatprep.mubr.f32.mxu0 0.0
    %396 = vmatmul.mubr.f32.gmra.mxu0 %v99
    %v397 = vpop.f32.mrf.mxu0
    %v398 = vadd.f32 %v76, %v397
    %v399 = vpop.f32.mrf.mxu0
    %v400 = vadd.f32 %v80, %v399
    %401 = vdwg.mxu0
    %v402 = vmax.f32 %v185, 0.0
    %v403 = vmax.f32 %v187, 0.0
    %v404 = vmax.f32 %v256, 0.0
    %v405 = vmax.f32 %v258, 0.0
    %v406 = vmax.f32 %v327, 0.0
    %v407 = vmax.f32 %v329, 0.0
    %v408 = vmax.f32 %v398, 0.0
    %v409 = vmax.f32 %v400, 0.0
    %v410 = vld [vmem:[#allocation2] sm:$0xff]
    %v411 = vld [vmem:[#allocation2 + $0x8] sm:$0xff]
    %v412 = vld [vmem:[#allocation2 + $0x10] sm:$0xff]
    %v413 = vld [vmem:[#allocation2 + $0x18] sm:$0xff]
    %v414 = vld [vmem:[#allocation2 + $0x20] sm:$0xff]
    %v415 = vld [vmem:[#allocation2 + $0x28] sm:$0xff]
    %v416 = vld [vmem:[#allocation2 + $0x30] sm:$0xff]
    %v417 = vld [vmem:[#allocation2 + $0x38] sm:$0xff]
    %v418 = vld [vmem:[#allocation2 + $0x40] sm:$0xff]
    %v419 = vld [vmem:[#allocation2 + $0x48] sm:$0xff]
    %v420 = vld [vmem:[#allocation2 + $0x50] sm:$0xff]
    %v421 = vld [vmem:[#allocation2 + $0x58] sm:$0xff]
    %v422 = vld [vmem:[#allocation2 + $0x60] sm:$0xff]
    %v423 = vld [vmem:[#allocation2 + $0x68] sm:$0xff]
    %v424 = vld [vmem:[#allocation2 + $0x70] sm:$0xff]
    %v425 = vld [vmem:[#allocation2 + $0x78] sm:$0xff]
    %v426 = vld [vmem:[#allocation2 + $0x80] sm:$0xff]
    %v427 = vld [vmem:[#allocation2 + $0x88] sm:$0xff]
    %v428 = vld [vmem:[#allocation2 + $0x90] sm:$0xff]
    %v429 = vld [vmem:[#allocation2 + $0x98] sm:$0xff]
    %v430 = vld [vmem:[#allocation2 + $0xa0] sm:$0xff]
    %v431 = vld [vmem:[#allocation2 + $0xa8] sm:$0xff]
    %v432 = vld [vmem:[#allocation2 + $0xb0] sm:$0xff]
    %v433 = vld [vmem:[#allocation2 + $0xb8] sm:$0xff]
    %v434 = vld [vmem:[#allocation2 + $0xc0] sm:$0xff]
    %v435 = vld [vmem:[#allocation2 + $0xc8] sm:$0xff]
    %v436 = vld [vmem:[#allocation2 + $0xd0] sm:$0xff]
    %v437 = vld [vmem:[#allocation2 + $0xd8] sm:$0xff]
    %v438 = vld [vmem:[#allocation2 + $0xe0] sm:$0xff]
    %v439 = vld [vmem:[#allocation2 + $0xe8] sm:$0xff]
    %v440 = vld [vmem:[#allocation2 + $0xf0] sm:$0xff]
    %v441 = vld [vmem:[#allocation2 + $0xf8] sm:$0xff]
    %v442 = vld [vmem:[#allocation2 + $0x100] sm:$0xff]
    %v443 = vld [vmem:[#allocation2 + $0x108] sm:$0xff]
    %v444 = vld [vmem:[#allocation2 + $0x110] sm:$0xff]
    %v445 = vld [vmem:[#allocation2 + $0x118] sm:$0xff]
    %v446 = vld [vmem:[#allocation2 + $0x120] sm:$0xff]
    %v447 = vld [vmem:[#allocation2 + $0x128] sm:$0xff]
    %v448 = vld [vmem:[#allocation2 + $0x130] sm:$0xff]
    %v449 = vld [vmem:[#allocation2 + $0x138] sm:$0xff]
    %v450 = vld [vmem:[#allocation2 + $0x140] sm:$0xff]
    %v451 = vld [vmem:[#allocation2 + $0x148] sm:$0xff]
    %v452 = vld [vmem:[#allocation2 + $0x150] sm:$0xff]
    %v453 = vld [vmem:[#allocation2 + $0x158] sm:$0xff]
    %v454 = vld [vmem:[#allocation2 + $0x160] sm:$0xff]
    %v455 = vld [vmem:[#allocation2 + $0x168] sm:$0xff]
    %v456 = vld [vmem:[#allocation2 + $0x170] sm:$0xff]
    %v457 = vld [vmem:[#allocation2 + $0x178] sm:$0xff]
    %v458 = vld [vmem:[#allocation2 + $0x180] sm:$0xff]
    %v459 = vld [vmem:[#allocation2 + $0x188] sm:$0xff]
    %v460 = vld [vmem:[#allocation2 + $0x190] sm:$0xff]
    %v461 = vld [vmem:[#allocation2 + $0x198] sm:$0xff]
    %v462 = vld [vmem:[#allocation2 + $0x1a0] sm:$0xff]
    %v463 = vld [vmem:[#allocation2 + $0x1a8] sm:$0xff]
    %v464 = vld [vmem:[#allocation2 + $0x1b0] sm:$0xff]
    %v465 = vld [vmem:[#allocation2 + $0x1b8] sm:$0xff]
    %v466 = vld [vmem:[#allocation2 + $0x1c0] sm:$0xff]
    %v467 = vld [vmem:[#allocation2 + $0x1c8] sm:$0xff]
    %v468 = vld [vmem:[#allocation2 + $0x1d0] sm:$0xff]
    %v469 = vld [vmem:[#allocation2 + $0x1d8] sm:$0xff]
    %v470 = vld [vmem:[#allocation2 + $0x1e0] sm:$0xff]
    %v471 = vld [vmem:[#allocation2 + $0x1e8] sm:$0xff]
    %v472 = vld [vmem:[#allocation2 + $0x1f0] sm:$0xff]
    %v473 = vld [vmem:[#allocation2 + $0x1f8] sm:$0xff]
    %v474 = vld [vmem:[#allocation2 + $0x200] sm:$0xff]
    %v475 = vld [vmem:[#allocation2 + $0x208] sm:$0xff]
    %v476 = vld [vmem:[#allocation2 + $0x210] sm:$0xff]
    %v477 = vld [vmem:[#allocation2 + $0x218] sm:$0xff]
    %v478 = vld [vmem:[#allocation2 + $0x220] sm:$0xff]
    %v479 = vld [vmem:[#allocation2 + $0x228] sm:$0xff]
    %v480 = vld [vmem:[#allocation2 + $0x230] sm:$0xff]
    %v481 = vld [vmem:[#allocation2 + $0x238] sm:$0xff]
    %v482 = vld [vmem:[#allocation2 + $0x240] sm:$0xff]
    %v483 = vld [vmem:[#allocation2 + $0x248] sm:$0xff]
    %v484 = vld [vmem:[#allocation2 + $0x250] sm:$0xff]
    %v485 = vld [vmem:[#allocation2 + $0x258] sm:$0xff]
    %v486 = vld [vmem:[#allocation2 + $0x260] sm:$0xff]
    %v487 = vld [vmem:[#allocation2 + $0x268] sm:$0xff]
    %v488 = vld [vmem:[#allocation2 + $0x270] sm:$0xff]
    %v489 = vld [vmem:[#allocation2 + $0x278] sm:$0xff]
    %v490 = vld [vmem:[#allocation2 + $0x280] sm:$0xff]
    %v491 = vld [vmem:[#allocation2 + $0x288] sm:$0xff]
    %v492 = vld [vmem:[#allocation2 + $0x290] sm:$0xff]
    %v493 = vld [vmem:[#allocation2 + $0x298] sm:$0xff]
    %v494 = vld [vmem:[#allocation2 + $0x2a0] sm:$0xff]
    %v495 = vld [vmem:[#allocation2 + $0x2a8] sm:$0xff]
    %v496 = vld [vmem:[#allocation2 + $0x2b0] sm:$0xff]
    %v497 = vld [vmem:[#allocation2 + $0x2b8] sm:$0xff]
    %v498 = vld [vmem:[#allocation2 + $0x2c0] sm:$0xff]
    %v499 = vld [vmem:[#allocation2 + $0x2c8] sm:$0xff]
    %v500 = vld [vmem:[#allocation2 + $0x2d0] sm:$0xff]
    %v501 = vld [vmem:[#allocation2 + $0x2d8] sm:$0xff]
    %v502 = vld [vmem:[#allocation2 + $0x2e0] sm:$0xff]
    %v503 = vld [vmem:[#allocation2 + $0x2e8] sm:$0xff]
    %v504 = vld [vmem:[#allocation2 + $0x2f0] sm:$0xff]
    %v505 = vld [vmem:[#allocation2 + $0x2f8] sm:$0xff]
    %v506 = vld [vmem:[#allocation2 + $0x300] sm:$0xff]
    %v507 = vld [vmem:[#allocation2 + $0x308] sm:$0xff]
    %v508 = vld [vmem:[#allocation2 + $0x310] sm:$0xff]
    %v509 = vld [vmem:[#allocation2 + $0x318] sm:$0xff]
    %v510 = vld [vmem:[#allocation2 + $0x320] sm:$0xff]
    %v511 = vld [vmem:[#allocation2 + $0x328] sm:$0xff]
    %v512 = vld [vmem:[#allocation2 + $0x330] sm:$0xff]
    %v513 = vld [vmem:[#allocation2 + $0x338] sm:$0xff]
    %v514 = vld [vmem:[#allocation2 + $0x340] sm:$0xff]
    %v515 = vld [vmem:[#allocation2 + $0x348] sm:$0xff]
    %v516 = vld [vmem:[#allocation2 + $0x350] sm:$0xff]
    %v517 = vld [vmem:[#allocation2 + $0x358] sm:$0xff]
    %v518 = vld [vmem:[#allocation2 + $0x360] sm:$0xff]
    %v519 = vld [vmem:[#allocation2 + $0x368] sm:$0xff]
    %v520 = vld [vmem:[#allocation2 + $0x370] sm:$0xff]
    %v521 = vld [vmem:[#allocation2 + $0x378] sm:$0xff]
    %v522 = vld [vmem:[#allocation2 + $0x380] sm:$0xff]
    %v523 = vld [vmem:[#allocation2 + $0x388] sm:$0xff]
    %v524 = vld [vmem:[#allocation2 + $0x390] sm:$0xff]
    %v525 = vld [vmem:[#allocation2 + $0x398] sm:$0xff]
    %v526 = vld [vmem:[#allocation2 + $0x3a0] sm:$0xff]
    %v527 = vld [vmem:[#allocation2 + $0x3a8] sm:$0xff]
    %v528 = vld [vmem:[#allocation2 + $0x3b0] sm:$0xff]
    %v529 = vld [vmem:[#allocation2 + $0x3b8] sm:$0xff]
    %v530 = vld [vmem:[#allocation2 + $0x3c0] sm:$0xff]
    %v531 = vld [vmem:[#allocation2 + $0x3c8] sm:$0xff]
    %v532 = vld [vmem:[#allocation2 + $0x3d0] sm:$0xff]
    %v533 = vld [vmem:[#allocation2 + $0x3d8] sm:$0xff]
    %v534 = vld [vmem:[#allocation2 + $0x3e0] sm:$0xff]
    %v535 = vld [vmem:[#allocation2 + $0x3e8] sm:$0xff]
    %v536 = vld [vmem:[#allocation2 + $0x3f0] sm:$0xff]
    %v537 = vld [vmem:[#allocation2 + $0x3f8] sm:$0xff]
    %v538 = vld [vmem:[#allocation2 + $0x400] sm:$0xff]
    %v539 = vld [vmem:[#allocation2 + $0x408] sm:$0xff]
    %v540 = vld [vmem:[#allocation2 + $0x410] sm:$0xff]
    %v541 = vld [vmem:[#allocation2 + $0x418] sm:$0xff]
    %v542 = vld [vmem:[#allocation2 + $0x420] sm:$0xff]
    %v543 = vld [vmem:[#allocation2 + $0x428] sm:$0xff]
    %v544 = vld [vmem:[#allocation2 + $0x430] sm:$0xff]
    %v545 = vld [vmem:[#allocation2 + $0x438] sm:$0xff]
    %v546 = vld [vmem:[#allocation2 + $0x440] sm:$0xff]
    %v547 = vld [vmem:[#allocation2 + $0x448] sm:$0xff]
    %v548 = vld [vmem:[#allocation2 + $0x450] sm:$0xff]
    %v549 = vld [vmem:[#allocation2 + $0x458] sm:$0xff]
    %v550 = vld [vmem:[#allocation2 + $0x460] sm:$0xff]
    %v551 = vld [vmem:[#allocation2 + $0x468] sm:$0xff]
    %v552 = vld [vmem:[#allocation2 + $0x470] sm:$0xff]
    %v553 = vld [vmem:[#allocation2 + $0x478] sm:$0xff]
    %v554 = vld [vmem:[#allocation2 + $0x480] sm:$0xff]
    %v555 = vld [vmem:[#allocation2 + $0x488] sm:$0xff]
    %v556 = vld [vmem:[#allocation2 + $0x490] sm:$0xff]
    %v557 = vld [vmem:[#allocation2 + $0x498] sm:$0xff]
    %v558 = vld [vmem:[#allocation2 + $0x4a0] sm:$0xff]
    %v559 = vld [vmem:[#allocation2 + $0x4a8] sm:$0xff]
    %v560 = vld [vmem:[#allocation2 + $0x4b0] sm:$0xff]
    %v561 = vld [vmem:[#allocation2 + $0x4b8] sm:$0xff]
    %v562 = vld [vmem:[#allocation2 + $0x4c0] sm:$0xff]
    %v563 = vld [vmem:[#allocation2 + $0x4c8] sm:$0xff]
    %v564 = vld [vmem:[#allocation2 + $0x4d0] sm:$0xff]
    %v565 = vld [vmem:[#allocation2 + $0x4d8] sm:$0xff]
    %v566 = vld [vmem:[#allocation2 + $0x4e0] sm:$0xff]
    %v567 = vld [vmem:[#allocation2 + $0x4e8] sm:$0xff]
    %v568 = vld [vmem:[#allocation2 + $0x4f0] sm:$0xff]
    %v569 = vld [vmem:[#allocation2 + $0x4f8] sm:$0xff]
    %v570 = vld [vmem:[#allocation2 + $0x500] sm:$0xff]
    %v571 = vld [vmem:[#allocation2 + $0x508] sm:$0xff]
    %v572 = vld [vmem:[#allocation2 + $0x510] sm:$0xff]
    %v573 = vld [vmem:[#allocation2 + $0x518] sm:$0xff]
    %v574 = vld [vmem:[#allocation2 + $0x520] sm:$0xff]
    %v575 = vld [vmem:[#allocation2 + $0x528] sm:$0xff]
    %v576 = vld [vmem:[#allocation2 + $0x530] sm:$0xff]
    %v577 = vld [vmem:[#allocation2 + $0x538] sm:$0xff]
    %v578 = vld [vmem:[#allocation2 + $0x540] sm:$0xff]
    %v579 = vld [vmem:[#allocation2 + $0x548] sm:$0xff]
    %v580 = vld [vmem:[#allocation2 + $0x550] sm:$0xff]
    %v581 = vld [vmem:[#allocation2 + $0x558] sm:$0xff]
    %v582 = vld [vmem:[#allocation2 + $0x560] sm:$0xff]
    %v583 = vld [vmem:[#allocation2 + $0x568] sm:$0xff]
    %v584 = vld [vmem:[#allocation2 + $0x570] sm:$0xff]
    %v585 = vld [vmem:[#allocation2 + $0x578] sm:$0xff]
    %v586 = vld [vmem:[#allocation2 + $0x580] sm:$0xff]
    %v587 = vld [vmem:[#allocation2 + $0x588] sm:$0xff]
    %v588 = vld [vmem:[#allocation2 + $0x590] sm:$0xff]
    %v589 = vld [vmem:[#allocation2 + $0x598] sm:$0xff]
    %v590 = vld [vmem:[#allocation2 + $0x5a0] sm:$0xff]
    %v591 = vld [vmem:[#allocation2 + $0x5a8] sm:$0xff]
    %v592 = vld [vmem:[#allocation2 + $0x5b0] sm:$0xff]
    %v593 = vld [vmem:[#allocation2 + $0x5b8] sm:$0xff]
    %v594 = vld [vmem:[#allocation2 + $0x5c0] sm:$0xff]
    %v595 = vld [vmem:[#allocation2 + $0x5c8] sm:$0xff]
    %v596 = vld [vmem:[#allocation2 + $0x5d0] sm:$0xff]
    %v597 = vld [vmem:[#allocation2 + $0x5d8] sm:$0xff]
    %v598 = vld [vmem:[#allocation2 + $0x5e0] sm:$0xff]
    %v599 = vld [vmem:[#allocation2 + $0x5e8] sm:$0xff]
    %v600 = vld [vmem:[#allocation2 + $0x5f0] sm:$0xff]
    %v601 = vld [vmem:[#allocation2 + $0x5f8] sm:$0xff]
    %v602 = vld [vmem:[#allocation2 + $0x600] sm:$0xff]
    %v603 = vld [vmem:[#allocation2 + $0x608] sm:$0xff]
    %v604 = vld [vmem:[#allocation2 + $0x610] sm:$0xff]
    %v605 = vld [vmem:[#allocation2 + $0x618] sm:$0xff]
    %v606 = vld [vmem:[#allocation2 + $0x620] sm:$0xff]
    %v607 = vld [vmem:[#allocation2 + $0x628] sm:$0xff]
    %v608 = vld [vmem:[#allocation2 + $0x630] sm:$0xff]
    %v609 = vld [vmem:[#allocation2 + $0x638] sm:$0xff]
    %v610 = vld [vmem:[#allocation2 + $0x640] sm:$0xff]
    %v611 = vld [vmem:[#allocation2 + $0x648] sm:$0xff]
    %v612 = vld [vmem:[#allocation2 + $0x650] sm:$0xff]
    %v613 = vld [vmem:[#allocation2 + $0x658] sm:$0xff]
    %v614 = vld [vmem:[#allocation2 + $0x660] sm:$0xff]
    %v615 = vld [vmem:[#allocation2 + $0x668] sm:$0xff]
    %v616 = vld [vmem:[#allocation2 + $0x670] sm:$0xff]
    %v617 = vld [vmem:[#allocation2 + $0x678] sm:$0xff]
    %v618 = vld [vmem:[#allocation2 + $0x680] sm:$0xff]
    %v619 = vld [vmem:[#allocation2 + $0x688] sm:$0xff]
    %v620 = vld [vmem:[#allocation2 + $0x690] sm:$0xff]
    %v621 = vld [vmem:[#allocation2 + $0x698] sm:$0xff]
    %v622 = vld [vmem:[#allocation2 + $0x6a0] sm:$0xff]
    %v623 = vld [vmem:[#allocation2 + $0x6a8] sm:$0xff]
    %v624 = vld [vmem:[#allocation2 + $0x6b0] sm:$0xff]
    %v625 = vld [vmem:[#allocation2 + $0x6b8] sm:$0xff]
    %v626 = vld [vmem:[#allocation2 + $0x6c0] sm:$0xff]
    %v627 = vld [vmem:[#allocation2 + $0x6c8] sm:$0xff]
    %v628 = vld [vmem:[#allocation2 + $0x6d0] sm:$0xff]
    %v629 = vld [vmem:[#allocation2 + $0x6d8] sm:$0xff]
    %v630 = vld [vmem:[#allocation2 + $0x6e0] sm:$0xff]
    %v631 = vld [vmem:[#allocation2 + $0x6e8] sm:$0xff]
    %v632 = vld [vmem:[#allocation2 + $0x6f0] sm:$0xff]
    %v633 = vld [vmem:[#allocation2 + $0x6f8] sm:$0xff]
    %v634 = vld [vmem:[#allocation2 + $0x700] sm:$0xff]
    %v635 = vld [vmem:[#allocation2 + $0x708] sm:$0xff]
    %v636 = vld [vmem:[#allocation2 + $0x710] sm:$0xff]
    %v637 = vld [vmem:[#allocation2 + $0x718] sm:$0xff]
    %v638 = vld [vmem:[#allocation2 + $0x720] sm:$0xff]
    %v639 = vld [vmem:[#allocation2 + $0x728] sm:$0xff]
    %v640 = vld [vmem:[#allocation2 + $0x730] sm:$0xff]
    %v641 = vld [vmem:[#allocation2 + $0x738] sm:$0xff]
    %v642 = vld [vmem:[#allocation2 + $0x740] sm:$0xff]
    %v643 = vld [vmem:[#allocation2 + $0x748] sm:$0xff]
    %v644 = vld [vmem:[#allocation2 + $0x750] sm:$0xff]
    %v645 = vld [vmem:[#allocation2 + $0x758] sm:$0xff]
    %v646 = vld [vmem:[#allocation2 + $0x760] sm:$0xff]
    %v647 = vld [vmem:[#allocation2 + $0x768] sm:$0xff]
    %v648 = vld [vmem:[#allocation2 + $0x770] sm:$0xff]
    %v649 = vld [vmem:[#allocation2 + $0x778] sm:$0xff]
    %v650 = vld [vmem:[#allocation2 + $0x780] sm:$0xff]
    %v651 = vld [vmem:[#allocation2 + $0x788] sm:$0xff]
    %v652 = vld [vmem:[#allocation2 + $0x790] sm:$0xff]
    %v653 = vld [vmem:[#allocation2 + $0x798] sm:$0xff]
    %v654 = vld [vmem:[#allocation2 + $0x7a0] sm:$0xff]
    %v655 = vld [vmem:[#allocation2 + $0x7a8] sm:$0xff]
    %v656 = vld [vmem:[#allocation2 + $0x7b0] sm:$0xff]
    %v657 = vld [vmem:[#allocation2 + $0x7b8] sm:$0xff]
    %v658 = vld [vmem:[#allocation2 + $0x7c0] sm:$0xff]
    %v659 = vld [vmem:[#allocation2 + $0x7c8] sm:$0xff]
    %v660 = vld [vmem:[#allocation2 + $0x7d0] sm:$0xff]
    %v661 = vld [vmem:[#allocation2 + $0x7d8] sm:$0xff]
    %v662 = vld [vmem:[#allocation2 + $0x7e0] sm:$0xff]
    %v663 = vld [vmem:[#allocation2 + $0x7e8] sm:$0xff]
    %v664 = vld [vmem:[#allocation2 + $0x7f0] sm:$0xff]
    %v665 = vld [vmem:[#allocation2 + $0x7f8] sm:$0xff]
    %v666 = vunpack.c.l.bf16 %v410
    %v667 = vunpack.c.h.bf16 %v410
    %v668 = vunpack.c.l.bf16 %v411
    %v669 = vunpack.c.h.bf16 %v411
    %v670 = vunpack.c.l.bf16 %v412
    %v671 = vunpack.c.h.bf16 %v412
    %v672 = vunpack.c.l.bf16 %v413
    %v673 = vunpack.c.h.bf16 %v413
    %v674 = vunpack.c.l.bf16 %v414
    %v675 = vunpack.c.h.bf16 %v414
    %v676 = vunpack.c.l.bf16 %v415
    %v677 = vunpack.c.h.bf16 %v415
    %v678 = vunpack.c.l.bf16 %v416
    %v679 = vunpack.c.h.bf16 %v416
    %v680 = vunpack.c.l.bf16 %v417
    %v681 = vunpack.c.h.bf16 %v417
    %v682 = vunpack.c.l.bf16 %v418
    %v683 = vunpack.c.h.bf16 %v418
    %v684 = vunpack.c.l.bf16 %v419
    %v685 = vunpack.c.h.bf16 %v419
    %v686 = vunpack.c.l.bf16 %v420
    %v687 = vunpack.c.h.bf16 %v420
    %v688 = vunpack.c.l.bf16 %v421
    %v689 = vunpack.c.h.bf16 %v421
    %v690 = vunpack.c.l.bf16 %v422
    %v691 = vunpack.c.h.bf16 %v422
    %v692 = vunpack.c.l.bf16 %v423
    %v693 = vunpack.c.h.bf16 %v423
    %v694 = vunpack.c.l.bf16 %v424
    %v695 = vunpack.c.h.bf16 %v424
    %v696 = vunpack.c.l.bf16 %v425
    %v697 = vunpack.c.h.bf16 %v425
    %v698 = vunpack.c.l.bf16 %v426
    %v699 = vunpack.c.h.bf16 %v426
    %v700 = vunpack.c.l.bf16 %v427
    %v701 = vunpack.c.h.bf16 %v427
    %v702 = vunpack.c.l.bf16 %v428
    %v703 = vunpack.c.h.bf16 %v428
    %v704 = vunpack.c.l.bf16 %v429
    %v705 = vunpack.c.h.bf16 %v429
    %v706 = vunpack.c.l.bf16 %v430
    %v707 = vunpack.c.h.bf16 %v430
    %v708 = vunpack.c.l.bf16 %v431
    %v709 = vunpack.c.h.bf16 %v431
    %v710 = vunpack.c.l.bf16 %v432
    %v711 = vunpack.c.h.bf16 %v432
    %v712 = vunpack.c.l.bf16 %v433
    %v713 = vunpack.c.h.bf16 %v433
    %v714 = vunpack.c.l.bf16 %v434
    %v715 = vunpack.c.h.bf16 %v434
    %v716 = vunpack.c.l.bf16 %v435
    %v717 = vunpack.c.h.bf16 %v435
    %v718 = vunpack.c.l.bf16 %v436
    %v719 = vunpack.c.h.bf16 %v436
    %v720 = vunpack.c.l.bf16 %v437
    %v721 = vunpack.c.h.bf16 %v437
    %v722 = vunpack.c.l.bf16 %v438
    %v723 = vunpack.c.h.bf16 %v438
    %v724 = vunpack.c.l.bf16 %v439
    %v725 = vunpack.c.h.bf16 %v439
    %v726 = vunpack.c.l.bf16 %v440
    %v727 = vunpack.c.h.bf16 %v440
    %v728 = vunpack.c.l.bf16 %v441
    %v729 = vunpack.c.h.bf16 %v441
    %v730 = vunpack.c.l.bf16 %v442
    %v731 = vunpack.c.h.bf16 %v442
    %v732 = vunpack.c.l.bf16 %v443
    %v733 = vunpack.c.h.bf16 %v443
    %v734 = vunpack.c.l.bf16 %v444
    %v735 = vunpack.c.h.bf16 %v444
    %v736 = vunpack.c.l.bf16 %v445
    %v737 = vunpack.c.h.bf16 %v445
    %v738 = vunpack.c.l.bf16 %v446
    %v739 = vunpack.c.h.bf16 %v446
    %v740 = vunpack.c.l.bf16 %v447
    %v741 = vunpack.c.h.bf16 %v447
    %v742 = vunpack.c.l.bf16 %v448
    %v743 = vunpack.c.h.bf16 %v448
    %v744 = vunpack.c.l.bf16 %v449
    %v745 = vunpack.c.h.bf16 %v449
    %v746 = vunpack.c.l.bf16 %v450
    %v747 = vunpack.c.h.bf16 %v450
    %v748 = vunpack.c.l.bf16 %v451
    %v749 = vunpack.c.h.bf16 %v451
    %v750 = vunpack.c.l.bf16 %v452
    %v751 = vunpack.c.h.bf16 %v452
    %v752 = vunpack.c.l.bf16 %v453
    %v753 = vunpack.c.h.bf16 %v453
    %v754 = vunpack.c.l.bf16 %v454
    %v755 = vunpack.c.h.bf16 %v454
    %v756 = vunpack.c.l.bf16 %v455
    %v757 = vunpack.c.h.bf16 %v455
    %v758 = vunpack.c.l.bf16 %v456
    %v759 = vunpack.c.h.bf16 %v456
    %v760 = vunpack.c.l.bf16 %v457
    %v761 = vunpack.c.h.bf16 %v457
    %v762 = vunpack.c.l.bf16 %v458
    %v763 = vunpack.c.h.bf16 %v458
    %v764 = vunpack.c.l.bf16 %v459
    %v765 = vunpack.c.h.bf16 %v459
    %v766 = vunpack.c.l.bf16 %v460
    %v767 = vunpack.c.h.bf16 %v460
    %v768 = vunpack.c.l.bf16 %v461
    %v769 = vunpack.c.h.bf16 %v461
    %v770 = vunpack.c.l.bf16 %v462
    %v771 = vunpack.c.h.bf16 %v462
    %v772 = vunpack.c.l.bf16 %v463
    %v773 = vunpack.c.h.bf16 %v463
    %v774 = vunpack.c.l.bf16 %v464
    %v775 = vunpack.c.h.bf16 %v464
    %v776 = vunpack.c.l.bf16 %v465
    %v777 = vunpack.c.h.bf16 %v465
    %v778 = vunpack.c.l.bf16 %v466
    %v779 = vunpack.c.h.bf16 %v466
    %v780 = vunpack.c.l.bf16 %v467
    %v781 = vunpack.c.h.bf16 %v467
    %v782 = vunpack.c.l.bf16 %v468
    %v783 = vunpack.c.h.bf16 %v468
    %v784 = vunpack.c.l.bf16 %v469
    %v785 = vunpack.c.h.bf16 %v469
    %v786 = vunpack.c.l.bf16 %v470
    %v787 = vunpack.c.h.bf16 %v470
    %v788 = vunpack.c.l.bf16 %v471
    %v789 = vunpack.c.h.bf16 %v471
    %v790 = vunpack.c.l.bf16 %v472
    %v791 = vunpack.c.h.bf16 %v472
    %v792 = vunpack.c.l.bf16 %v473
    %v793 = vunpack.c.h.bf16 %v473
    %v794 = vunpack.c.l.bf16 %v474
    %v795 = vunpack.c.h.bf16 %v474
    %v796 = vunpack.c.l.bf16 %v475
    %v797 = vunpack.c.h.bf16 %v475
    %v798 = vunpack.c.l.bf16 %v476
    %v799 = vunpack.c.h.bf16 %v476
    %v800 = vunpack.c.l.bf16 %v477
    %v801 = vunpack.c.h.bf16 %v477
    %v802 = vunpack.c.l.bf16 %v478
    %v803 = vunpack.c.h.bf16 %v478
    %v804 = vunpack.c.l.bf16 %v479
    %v805 = vunpack.c.h.bf16 %v479
    %v806 = vunpack.c.l.bf16 %v480
    %v807 = vunpack.c.h.bf16 %v480
    %v808 = vunpack.c.l.bf16 %v481
    %v809 = vunpack.c.h.bf16 %v481
    %v810 = vunpack.c.l.bf16 %v482
    %v811 = vunpack.c.h.bf16 %v482
    %v812 = vunpack.c.l.bf16 %v483
    %v813 = vunpack.c.h.bf16 %v483
    %v814 = vunpack.c.l.bf16 %v484
    %v815 = vunpack.c.h.bf16 %v484
    %v816 = vunpack.c.l.bf16 %v485
    %v817 = vunpack.c.h.bf16 %v485
    %v818 = vunpack.c.l.bf16 %v486
    %v819 = vunpack.c.h.bf16 %v486
    %v820 = vunpack.c.l.bf16 %v487
    %v821 = vunpack.c.h.bf16 %v487
    %v822 = vunpack.c.l.bf16 %v488
    %v823 = vunpack.c.h.bf16 %v488
    %v824 = vunpack.c.l.bf16 %v489
    %v825 = vunpack.c.h.bf16 %v489
    %v826 = vunpack.c.l.bf16 %v490
    %v827 = vunpack.c.h.bf16 %v490
    %v828 = vunpack.c.l.bf16 %v491
    %v829 = vunpack.c.h.bf16 %v491
    %v830 = vunpack.c.l.bf16 %v492
    %v831 = vunpack.c.h.bf16 %v492
    %v832 = vunpack.c.l.bf16 %v493
    %v833 = vunpack.c.h.bf16 %v493
    %v834 = vunpack.c.l.bf16 %v494
    %v835 = vunpack.c.h.bf16 %v494
    %v836 = vunpack.c.l.bf16 %v495
    %v837 = vunpack.c.h.bf16 %v495
    %v838 = vunpack.c.l.bf16 %v496
    %v839 = vunpack.c.h.bf16 %v496
    %v840 = vunpack.c.l.bf16 %v497
    %v841 = vunpack.c.h.bf16 %v497
    %v842 = vunpack.c.l.bf16 %v498
    %v843 = vunpack.c.h.bf16 %v498
    %v844 = vunpack.c.l.bf16 %v499
    %v845 = vunpack.c.h.bf16 %v499
    %v846 = vunpack.c.l.bf16 %v500
    %v847 = vunpack.c.h.bf16 %v500
    %v848 = vunpack.c.l.bf16 %v501
    %v849 = vunpack.c.h.bf16 %v501
    %v850 = vunpack.c.l.bf16 %v502
    %v851 = vunpack.c.h.bf16 %v502
    %v852 = vunpack.c.l.bf16 %v503
    %v853 = vunpack.c.h.bf16 %v503
    %v854 = vunpack.c.l.bf16 %v504
    %v855 = vunpack.c.h.bf16 %v504
    %v856 = vunpack.c.l.bf16 %v505
    %v857 = vunpack.c.h.bf16 %v505
    %v858 = vunpack.c.l.bf16 %v506
    %v859 = vunpack.c.h.bf16 %v506
    %v860 = vunpack.c.l.bf16 %v507
    %v861 = vunpack.c.h.bf16 %v507
    %v862 = vunpack.c.l.bf16 %v508
    %v863 = vunpack.c.h.bf16 %v508
    %v864 = vunpack.c.l.bf16 %v509
    %v865 = vunpack.c.h.bf16 %v509
    %v866 = vunpack.c.l.bf16 %v510
    %v867 = vunpack.c.h.bf16 %v510
    %v868 = vunpack.c.l.bf16 %v511
    %v869 = vunpack.c.h.bf16 %v511
    %v870 = vunpack.c.l.bf16 %v512
    %v871 = vunpack.c.h.bf16 %v512
    %v872 = vunpack.c.l.bf16 %v513
    %v873 = vunpack.c.h.bf16 %v513
    %v874 = vunpack.c.l.bf16 %v514
    %v875 = vunpack.c.h.bf16 %v514
    %v876 = vunpack.c.l.bf16 %v515
    %v877 = vunpack.c.h.bf16 %v515
    %v878 = vunpack.c.l.bf16 %v516
    %v879 = vunpack.c.h.bf16 %v516
    %v880 = vunpack.c.l.bf16 %v517
    %v881 = vunpack.c.h.bf16 %v517
    %v882 = vunpack.c.l.bf16 %v518
    %v883 = vunpack.c.h.bf16 %v518
    %v884 = vunpack.c.l.bf16 %v519
    %v885 = vunpack.c.h.bf16 %v519
    %v886 = vunpack.c.l.bf16 %v520
    %v887 = vunpack.c.h.bf16 %v520
    %v888 = vunpack.c.l.bf16 %v521
    %v889 = vunpack.c.h.bf16 %v521
    %v890 = vunpack.c.l.bf16 %v522
    %v891 = vunpack.c.h.bf16 %v522
    %v892 = vunpack.c.l.bf16 %v523
    %v893 = vunpack.c.h.bf16 %v523
    %v894 = vunpack.c.l.bf16 %v524
    %v895 = vunpack.c.h.bf16 %v524
    %v896 = vunpack.c.l.bf16 %v525
    %v897 = vunpack.c.h.bf16 %v525
    %v898 = vunpack.c.l.bf16 %v526
    %v899 = vunpack.c.h.bf16 %v526
    %v900 = vunpack.c.l.bf16 %v527
    %v901 = vunpack.c.h.bf16 %v527
    %v902 = vunpack.c.l.bf16 %v528
    %v903 = vunpack.c.h.bf16 %v528
    %v904 = vunpack.c.l.bf16 %v529
    %v905 = vunpack.c.h.bf16 %v529
    %v906 = vunpack.c.l.bf16 %v530
    %v907 = vunpack.c.h.bf16 %v530
    %v908 = vunpack.c.l.bf16 %v531
    %v909 = vunpack.c.h.bf16 %v531
    %v910 = vunpack.c.l.bf16 %v532
    %v911 = vunpack.c.h.bf16 %v532
    %v912 = vunpack.c.l.bf16 %v533
    %v913 = vunpack.c.h.bf16 %v533
    %v914 = vunpack.c.l.bf16 %v534
    %v915 = vunpack.c.h.bf16 %v534
    %v916 = vunpack.c.l.bf16 %v535
    %v917 = vunpack.c.h.bf16 %v535
    %v918 = vunpack.c.l.bf16 %v536
    %v919 = vunpack.c.h.bf16 %v536
    %v920 = vunpack.c.l.bf16 %v537
    %v921 = vunpack.c.h.bf16 %v537
    %v922 = vunpack.c.l.bf16 %v538
    %v923 = vunpack.c.h.bf16 %v538
    %v924 = vunpack.c.l.bf16 %v539
    %v925 = vunpack.c.h.bf16 %v539
    %v926 = vunpack.c.l.bf16 %v540
    %v927 = vunpack.c.h.bf16 %v540
    %v928 = vunpack.c.l.bf16 %v541
    %v929 = vunpack.c.h.bf16 %v541
    %v930 = vunpack.c.l.bf16 %v542
    %v931 = vunpack.c.h.bf16 %v542
    %v932 = vunpack.c.l.bf16 %v543
    %v933 = vunpack.c.h.bf16 %v543
    %v934 = vunpack.c.l.bf16 %v544
    %v935 = vunpack.c.h.bf16 %v544
    %v936 = vunpack.c.l.bf16 %v545
    %v937 = vunpack.c.h.bf16 %v545
    %v938 = vunpack.c.l.bf16 %v546
    %v939 = vunpack.c.h.bf16 %v546
    %v940 = vunpack.c.l.bf16 %v547
    %v941 = vunpack.c.h.bf16 %v547
    %v942 = vunpack.c.l.bf16 %v548
    %v943 = vunpack.c.h.bf16 %v548
    %v944 = vunpack.c.l.bf16 %v549
    %v945 = vunpack.c.h.bf16 %v549
    %v946 = vunpack.c.l.bf16 %v550
    %v947 = vunpack.c.h.bf16 %v550
    %v948 = vunpack.c.l.bf16 %v551
    %v949 = vunpack.c.h.bf16 %v551
    %v950 = vunpack.c.l.bf16 %v552
    %v951 = vunpack.c.h.bf16 %v552
    %v952 = vunpack.c.l.bf16 %v553
    %v953 = vunpack.c.h.bf16 %v553
    %v954 = vunpack.c.l.bf16 %v554
    %v955 = vunpack.c.h.bf16 %v554
    %v956 = vunpack.c.l.bf16 %v555
    %v957 = vunpack.c.h.bf16 %v555
    %v958 = vunpack.c.l.bf16 %v556
    %v959 = vunpack.c.h.bf16 %v556
    %v960 = vunpack.c.l.bf16 %v557
    %v961 = vunpack.c.h.bf16 %v557
    %v962 = vunpack.c.l.bf16 %v558
    %v963 = vunpack.c.h.bf16 %v558
    %v964 = vunpack.c.l.bf16 %v559
    %v965 = vunpack.c.h.bf16 %v559
    %v966 = vunpack.c.l.bf16 %v560
    %v967 = vunpack.c.h.bf16 %v560
    %v968 = vunpack.c.l.bf16 %v561
    %v969 = vunpack.c.h.bf16 %v561
    %v970 = vunpack.c.l.bf16 %v562
    %v971 = vunpack.c.h.bf16 %v562
    %v972 = vunpack.c.l.bf16 %v563
    %v973 = vunpack.c.h.bf16 %v563
    %v974 = vunpack.c.l.bf16 %v564
    %v975 = vunpack.c.h.bf16 %v564
    %v976 = vunpack.c.l.bf16 %v565
    %v977 = vunpack.c.h.bf16 %v565
    %v978 = vunpack.c.l.bf16 %v566
    %v979 = vunpack.c.h.bf16 %v566
    %v980 = vunpack.c.l.bf16 %v567
    %v981 = vunpack.c.h.bf16 %v567
    %v982 = vunpack.c.l.bf16 %v568
    %v983 = vunpack.c.h.bf16 %v568
    %v984 = vunpack.c.l.bf16 %v569
    %v985 = vunpack.c.h.bf16 %v569
    %v986 = vunpack.c.l.bf16 %v570
    %v987 = vunpack.c.h.bf16 %v570
    %v988 = vunpack.c.l.bf16 %v571
    %v989 = vunpack.c.h.bf16 %v571
    %v990 = vunpack.c.l.bf16 %v572
    %v991 = vunpack.c.h.bf16 %v572
    %v992 = vunpack.c.l.bf16 %v573
    %v993 = vunpack.c.h.bf16 %v573
    %v994 = vunpack.c.l.bf16 %v574
    %v995 = vunpack.c.h.bf16 %v574
    %v996 = vunpack.c.l.bf16 %v575
    %v997 = vunpack.c.h.bf16 %v575
    %v998 = vunpack.c.l.bf16 %v576
    %v999 = vunpack.c.h.bf16 %v576
    %v1000 = vunpack.c.l.bf16 %v577
    %v1001 = vunpack.c.h.bf16 %v577
    %v1002 = vunpack.c.l.bf16 %v578
    %v1003 = vunpack.c.h.bf16 %v578
    %v1004 = vunpack.c.l.bf16 %v579
    %v1005 = vunpack.c.h.bf16 %v579
    %v1006 = vunpack.c.l.bf16 %v580
    %v1007 = vunpack.c.h.bf16 %v580
    %v1008 = vunpack.c.l.bf16 %v581
    %v1009 = vunpack.c.h.bf16 %v581
    %v1010 = vunpack.c.l.bf16 %v582
    %v1011 = vunpack.c.h.bf16 %v582
    %v1012 = vunpack.c.l.bf16 %v583
    %v1013 = vunpack.c.h.bf16 %v583
    %v1014 = vunpack.c.l.bf16 %v584
    %v1015 = vunpack.c.h.bf16 %v584
    %v1016 = vunpack.c.l.bf16 %v585
    %v1017 = vunpack.c.h.bf16 %v585
    %v1018 = vunpack.c.l.bf16 %v586
    %v1019 = vunpack.c.h.bf16 %v586
    %v1020 = vunpack.c.l.bf16 %v587
    %v1021 = vunpack.c.h.bf16 %v587
    %v1022 = vunpack.c.l.bf16 %v588
    %v1023 = vunpack.c.h.bf16 %v588
    %v1024 = vunpack.c.l.bf16 %v589
    %v1025 = vunpack.c.h.bf16 %v589
    %v1026 = vunpack.c.l.bf16 %v590
    %v1027 = vunpack.c.h.bf16 %v590
    %v1028 = vunpack.c.l.bf16 %v591
    %v1029 = vunpack.c.h.bf16 %v591
    %v1030 = vunpack.c.l.bf16 %v592
    %v1031 = vunpack.c.h.bf16 %v592
    %v1032 = vunpack.c.l.bf16 %v593
    %v1033 = vunpack.c.h.bf16 %v593
    %v1034 = vunpack.c.l.bf16 %v594
    %v1035 = vunpack.c.h.bf16 %v594
    %v1036 = vunpack.c.l.bf16 %v595
    %v1037 = vunpack.c.h.bf16 %v595
    %v1038 = vunpack.c.l.bf16 %v596
    %v1039 = vunpack.c.h.bf16 %v596
    %v1040 = vunpack.c.l.bf16 %v597
    %v1041 = vunpack.c.h.bf16 %v597
    %v1042 = vunpack.c.l.bf16 %v598
    %v1043 = vunpack.c.h.bf16 %v598
    %v1044 = vunpack.c.l.bf16 %v599
    %v1045 = vunpack.c.h.bf16 %v599
    %v1046 = vunpack.c.l.bf16 %v600
    %v1047 = vunpack.c.h.bf16 %v600
    %v1048 = vunpack.c.l.bf16 %v601
    %v1049 = vunpack.c.h.bf16 %v601
    %v1050 = vunpack.c.l.bf16 %v602
    %v1051 = vunpack.c.h.bf16 %v602
    %v1052 = vunpack.c.l.bf16 %v603
    %v1053 = vunpack.c.h.bf16 %v603
    %v1054 = vunpack.c.l.bf16 %v604
    %v1055 = vunpack.c.h.bf16 %v604
    %v1056 = vunpack.c.l.bf16 %v605
    %v1057 = vunpack.c.h.bf16 %v605
    %v1058 = vunpack.c.l.bf16 %v606
    %v1059 = vunpack.c.h.bf16 %v606
    %v1060 = vunpack.c.l.bf16 %v607
    %v1061 = vunpack.c.h.bf16 %v607
    %v1062 = vunpack.c.l.bf16 %v608
    %v1063 = vunpack.c.h.bf16 %v608
    %v1064 = vunpack.c.l.bf16 %v609
    %v1065 = vunpack.c.h.bf16 %v609
    %v1066 = vunpack.c.l.bf16 %v610
    %v1067 = vunpack.c.h.bf16 %v610
    %v1068 = vunpack.c.l.bf16 %v611
    %v1069 = vunpack.c.h.bf16 %v611
    %v1070 = vunpack.c.l.bf16 %v612
    %v1071 = vunpack.c.h.bf16 %v612
    %v1072 = vunpack.c.l.bf16 %v613
    %v1073 = vunpack.c.h.bf16 %v613
    %v1074 = vunpack.c.l.bf16 %v614
    %v1075 = vunpack.c.h.bf16 %v614
    %v1076 = vunpack.c.l.bf16 %v615
    %v1077 = vunpack.c.h.bf16 %v615
    %v1078 = vunpack.c.l.bf16 %v616
    %v1079 = vunpack.c.h.bf16 %v616
    %v1080 = vunpack.c.l.bf16 %v617
    %v1081 = vunpack.c.h.bf16 %v617
    %v1082 = vunpack.c.l.bf16 %v618
    %v1083 = vunpack.c.h.bf16 %v618
    %v1084 = vunpack.c.l.bf16 %v619
    %v1085 = vunpack.c.h.bf16 %v619
    %v1086 = vunpack.c.l.bf16 %v620
    %v1087 = vunpack.c.h.bf16 %v620
    %v1088 = vunpack.c.l.bf16 %v621
    %v1089 = vunpack.c.h.bf16 %v621
    %v1090 = vunpack.c.l.bf16 %v622
    %v1091 = vunpack.c.h.bf16 %v622
    %v1092 = vunpack.c.l.bf16 %v623
    %v1093 = vunpack.c.h.bf16 %v623
    %v1094 = vunpack.c.l.bf16 %v624
    %v1095 = vunpack.c.h.bf16 %v624
    %v1096 = vunpack.c.l.bf16 %v625
    %v1097 = vunpack.c.h.bf16 %v625
    %v1098 = vunpack.c.l.bf16 %v626
    %v1099 = vunpack.c.h.bf16 %v626
    %v1100 = vunpack.c.l.bf16 %v627
    %v1101 = vunpack.c.h.bf16 %v627
    %v1102 = vunpack.c.l.bf16 %v628
    %v1103 = vunpack.c.h.bf16 %v628
    %v1104 = vunpack.c.l.bf16 %v629
    %v1105 = vunpack.c.h.bf16 %v629
    %v1106 = vunpack.c.l.bf16 %v630
    %v1107 = vunpack.c.h.bf16 %v630
    %v1108 = vunpack.c.l.bf16 %v631
    %v1109 = vunpack.c.h.bf16 %v631
    %v1110 = vunpack.c.l.bf16 %v632
    %v1111 = vunpack.c.h.bf16 %v632
    %v1112 = vunpack.c.l.bf16 %v633
    %v1113 = vunpack.c.h.bf16 %v633
    %v1114 = vunpack.c.l.bf16 %v634
    %v1115 = vunpack.c.h.bf16 %v634
    %v1116 = vunpack.c.l.bf16 %v635
    %v1117 = vunpack.c.h.bf16 %v635
    %v1118 = vunpack.c.l.bf16 %v636
    %v1119 = vunpack.c.h.bf16 %v636
    %v1120 = vunpack.c.l.bf16 %v637
    %v1121 = vunpack.c.h.bf16 %v637
    %v1122 = vunpack.c.l.bf16 %v638
    %v1123 = vunpack.c.h.bf16 %v638
    %v1124 = vunpack.c.l.bf16 %v639
    %v1125 = vunpack.c.h.bf16 %v639
    %v1126 = vunpack.c.l.bf16 %v640
    %v1127 = vunpack.c.h.bf16 %v640
    %v1128 = vunpack.c.l.bf16 %v641
    %v1129 = vunpack.c.h.bf16 %v641
    %v1130 = vunpack.c.l.bf16 %v642
    %v1131 = vunpack.c.h.bf16 %v642
    %v1132 = vunpack.c.l.bf16 %v643
    %v1133 = vunpack.c.h.bf16 %v643
    %v1134 = vunpack.c.l.bf16 %v644
    %v1135 = vunpack.c.h.bf16 %v644
    %v1136 = vunpack.c.l.bf16 %v645
    %v1137 = vunpack.c.h.bf16 %v645
    %v1138 = vunpack.c.l.bf16 %v646
    %v1139 = vunpack.c.h.bf16 %v646
    %v1140 = vunpack.c.l.bf16 %v647
    %v1141 = vunpack.c.h.bf16 %v647
    %v1142 = vunpack.c.l.bf16 %v648
    %v1143 = vunpack.c.h.bf16 %v648
    %v1144 = vunpack.c.l.bf16 %v649
    %v1145 = vunpack.c.h.bf16 %v649
    %v1146 = vunpack.c.l.bf16 %v650
    %v1147 = vunpack.c.h.bf16 %v650
    %v1148 = vunpack.c.l.bf16 %v651
    %v1149 = vunpack.c.h.bf16 %v651
    %v1150 = vunpack.c.l.bf16 %v652
    %v1151 = vunpack.c.h.bf16 %v652
    %v1152 = vunpack.c.l.bf16 %v653
    %v1153 = vunpack.c.h.bf16 %v653
    %v1154 = vunpack.c.l.bf16 %v654
    %v1155 = vunpack.c.h.bf16 %v654
    %v1156 = vunpack.c.l.bf16 %v655
    %v1157 = vunpack.c.h.bf16 %v655
    %v1158 = vunpack.c.l.bf16 %v656
    %v1159 = vunpack.c.h.bf16 %v656
    %v1160 = vunpack.c.l.bf16 %v657
    %v1161 = vunpack.c.h.bf16 %v657
    %v1162 = vunpack.c.l.bf16 %v658
    %v1163 = vunpack.c.h.bf16 %v658
    %v1164 = vunpack.c.l.bf16 %v659
    %v1165 = vunpack.c.h.bf16 %v659
    %v1166 = vunpack.c.l.bf16 %v660
    %v1167 = vunpack.c.h.bf16 %v660
    %v1168 = vunpack.c.l.bf16 %v661
    %v1169 = vunpack.c.h.bf16 %v661
    %v1170 = vunpack.c.l.bf16 %v662
    %v1171 = vunpack.c.h.bf16 %v662
    %v1172 = vunpack.c.l.bf16 %v663
    %v1173 = vunpack.c.h.bf16 %v663
    %v1174 = vunpack.c.l.bf16 %v664
    %v1175 = vunpack.c.h.bf16 %v664
    %v1176 = vunpack.c.l.bf16 %v665
    %v1177 = vunpack.c.h.bf16 %v665
    %v1178 = vld [vmem:[%s4] sm:$0xf]
    %v1180 = vlaneseq
    %v1181 = vshrl.u32 %v1180, 7
    %v1182 = vsub.s32 0, %v1181
    %v1183 = vrot.slane %v1178, %v1182
    %v1184 = vlaneseq
    %v1185 = vshrl.u32 %v1184, 7
    %v1186 = vsub.s32 1, %v1185
    %v1187 = vrot.slane %v1178, %v1186
    %v1188 = vlaneseq
    %v1189 = vshrl.u32 %v1188, 7
    %v1190 = vsub.s32 2, %v1189
    %v1191 = vrot.slane %v1178, %v1190
    %v1192 = vlaneseq
    %v1193 = vshrl.u32 %v1192, 7
    %v1194 = vsub.s32 3, %v1193
    %v1195 = vrot.slane %v1178, %v1194
    %1200 = vmatprep.subr.mxu0 %v727
    %1201 = vmatpush1.msra.mxu0 %v726
    %1202 = vmatprep.subr.mxu0 %v723
    %1203 = vmatpush1.msra.mxu0 %v722
    %1204 = vmatprep.subr.mxu0 %v719
    %1205 = vmatpush1.msra.mxu0 %v718
    %1206 = vmatprep.subr.mxu0 %v715
    %1207 = vmatpush1.msra.mxu0 %v714
    %1208 = vmatprep.subr.mxu0 %v711
    %1209 = vmatpush1.msra.mxu0 %v710
    %1210 = vmatprep.subr.mxu0 %v707
    %1211 = vmatpush1.msra.mxu0 %v706
    %1212 = vmatprep.subr.mxu0 %v703
    %1213 = vmatpush1.msra.mxu0 %v702
    %1214 = vmatprep.subr.mxu0 %v699
    %1215 = vmatpush1.msra.mxu0 %v698
    %1216 = vmatprep.subr.mxu0 %v695
    %1217 = vmatpush1.msra.mxu0 %v694
    %1218 = vmatprep.subr.mxu0 %v691
    %1219 = vmatpush1.msra.mxu0 %v690
    %1220 = vmatprep.subr.mxu0 %v687
    %1221 = vmatpush1.msra.mxu0 %v686
    %1222 = vmatprep.subr.mxu0 %v683
    %1223 = vmatpush1.msra.mxu0 %v682
    %1224 = vmatprep.subr.mxu0 %v679
    %1225 = vmatpush1.msra.mxu0 %v678
    %1226 = vmatprep.subr.mxu0 %v675
    %1227 = vmatpush1.msra.mxu0 %v674
    %1228 = vmatprep.subr.mxu0 %v671
    %1229 = vmatpush1.msra.mxu0 %v670
    %1230 = vmatprep.subr.mxu0 %v667
    %1231 = vmatpush1.msra.mxu0 %v666
    %1232 = vmatprep.subr.mxu0 %v791
    %1233 = vmatpush2.msra.mxu0 %v790
    %1234 = vmatprep.subr.mxu0 %v787
    %1235 = vmatpush2.msra.mxu0 %v786
    %1236 = vmatprep.subr.mxu0 %v783
    %1237 = vmatpush2.msra.mxu0 %v782
    %1238 = vmatprep.subr.mxu0 %v779
    %1239 = vmatpush2.msra.mxu0 %v778
    %1240 = vmatprep.subr.mxu0 %v775
    %1241 = vmatpush2.msra.mxu0 %v774
    %1242 = vmatprep.subr.mxu0 %v771
    %1243 = vmatpush2.msra.mxu0 %v770
    %1244 = vmatprep.subr.mxu0 %v767
    %1245 = vmatpush2.msra.mxu0 %v766
    %1246 = vmatprep.subr.mxu0 %v763
    %1247 = vmatpush2.msra.mxu0 %v762
    %1248 = vmatprep.subr.mxu0 %v759
    %1249 = vmatpush2.msra.mxu0 %v758
    %1250 = vmatprep.subr.mxu0 %v755
    %1251 = vmatpush2.msra.mxu0 %v754
    %1252 = vmatprep.subr.mxu0 %v751
    %1253 = vmatpush2.msra.mxu0 %v750
    %1254 = vmatprep.subr.mxu0 %v747
    %1255 = vmatpush2.msra.mxu0 %v746
    %1256 = vmatprep.subr.mxu0 %v743
    %1257 = vmatpush2.msra.mxu0 %v742
    %1258 = vmatprep.subr.mxu0 %v739
    %1259 = vmatpush2.msra.mxu0 %v738
    %1260 = vmatprep.subr.mxu0 %v735
    %1261 = vmatpush2.msra.mxu0 %v734
    %1262 = vmatprep.subr.mxu0 %v731
    %1263 = vmatpush2.msra.mxu0 %v730
    %1264 = vmatprep.mubr.f32.mxu0 %v403
    %1265 = vmatmul.mubr.f32.gmra.mxu0 %v402
    %v1266 = vpop.f32.mrf.mxu0
    %v1267 = vadd.f32 %v1183, %v1266
    %v1268 = vpop.f32.mrf.mxu0
    %v1269 = vadd.f32 %v1187, %v1268
    %1270 = vdwg.mxu0
    %1271 = vmatprep.subr.mxu0 %v855
    %1272 = vmatpush1.msra.mxu0 %v854
    %1273 = vmatprep.subr.mxu0 %v851
    %1274 = vmatpush1.msra.mxu0 %v850
    %1275 = vmatprep.subr.mxu0 %v847
    %1276 = vmatpush1.msra.mxu0 %v846
    %1277 = vmatprep.subr.mxu0 %v843
    %1278 = vmatpush1.msra.mxu0 %v842
    %1279 = vmatprep.subr.mxu0 %v839
    %1280 = vmatpush1.msra.mxu0 %v838
    %1281 = vmatprep.subr.mxu0 %v835
    %1282 = vmatpush1.msra.mxu0 %v834
    %1283 = vmatprep.subr.mxu0 %v831
    %1284 = vmatpush1.msra.mxu0 %v830
    %1285 = vmatprep.subr.mxu0 %v827
    %1286 = vmatpush1.msra.mxu0 %v826
    %1287 = vmatprep.subr.mxu0 %v823
    %1288 = vmatpush1.msra.mxu0 %v822
    %1289 = vmatprep.subr.mxu0 %v819
    %1290 = vmatpush1.msra.mxu0 %v818
    %1291 = vmatprep.subr.mxu0 %v815
    %1292 = vmatpush1.msra.mxu0 %v814
    %1293 = vmatprep.subr.mxu0 %v811
    %1294 = vmatpush1.msra.mxu0 %v810
    %1295 = vmatprep.subr.mxu0 %v807
    %1296 = vmatpush1.msra.mxu0 %v806
    %1297 = vmatprep.subr.mxu0 %v803
    %1298 = vmatpush1.msra.mxu0 %v802
    %1299 = vmatprep.subr.mxu0 %v799
    %1300 = vmatpush1.msra.mxu0 %v798
    %1301 = vmatprep.subr.mxu0 %v795
    %1302 = vmatpush1.msra.mxu0 %v794
    %1303 = vmatprep.subr.mxu0 %v919
    %1304 = vmatpush2.msra.mxu0 %v918
    %1305 = vmatprep.subr.mxu0 %v915
    %1306 = vmatpush2.msra.mxu0 %v914
    %1307 = vmatprep.subr.mxu0 %v911
    %1308 = vmatpush2.msra.mxu0 %v910
    %1309 = vmatprep.subr.mxu0 %v907
    %1310 = vmatpush2.msra.mxu0 %v906
    %1311 = vmatprep.subr.mxu0 %v903
    %1312 = vmatpush2.msra.mxu0 %v902
    %1313 = vmatprep.subr.mxu0 %v899
    %1314 = vmatpush2.msra.mxu0 %v898
    %1315 = vmatprep.subr.mxu0 %v895
    %1316 = vmatpush2.msra.mxu0 %v894
    %1317 = vmatprep.subr.mxu0 %v891
    %1318 = vmatpush2.msra.mxu0 %v890
    %1319 = vmatprep.subr.mxu0 %v887
    %1320 = vmatpush2.msra.mxu0 %v886
    %1321 = vmatprep.subr.mxu0 %v883
    %1322 = vmatpush2.msra.mxu0 %v882
    %1323 = vmatprep.subr.mxu0 %v879
    %1324 = vmatpush2.msra.mxu0 %v878
    %1325 = vmatprep.subr.mxu0 %v875
    %1326 = vmatpush2.msra.mxu0 %v874
    %1327 = vmatprep.subr.mxu0 %v871
    %1328 = vmatpush2.msra.mxu0 %v870
    %1329 = vmatprep.subr.mxu0 %v867
    %1330 = vmatpush2.msra.mxu0 %v866
    %1331 = vmatprep.subr.mxu0 %v863
    %1332 = vmatpush2.msra.mxu0 %v862
    %1333 = vmatprep.subr.mxu0 %v859
    %1334 = vmatpush2.msra.mxu0 %v858
    %1335 = vmatprep.mubr.f32.mxu0 %v405
    %1336 = vmatmul.mubr.f32.gmra.mxu0 %v404
    %v1337 = vpop.f32.mrf.mxu0
    %v1338 = vadd.f32 %v1267, %v1337
    %v1339 = vpop.f32.mrf.mxu0
    %v1340 = vadd.f32 %v1269, %v1339
    %1341 = vdwg.mxu0
    %1342 = vmatprep.subr.mxu0 %v983
    %1343 = vmatpush1.msra.mxu0 %v982
    %1344 = vmatprep.subr.mxu0 %v979
    %1345 = vmatpush1.msra.mxu0 %v978
    %1346 = vmatprep.subr.mxu0 %v975
    %1347 = vmatpush1.msra.mxu0 %v974
    %1348 = vmatprep.subr.mxu0 %v971
    %1349 = vmatpush1.msra.mxu0 %v970
    %1350 = vmatprep.subr.mxu0 %v967
    %1351 = vmatpush1.msra.mxu0 %v966
    %1352 = vmatprep.subr.mxu0 %v963
    %1353 = vmatpush1.msra.mxu0 %v962
    %1354 = vmatprep.subr.mxu0 %v959
    %1355 = vmatpush1.msra.mxu0 %v958
    %1356 = vmatprep.subr.mxu0 %v955
    %1357 = vmatpush1.msra.mxu0 %v954
    %1358 = vmatprep.subr.mxu0 %v951
    %1359 = vmatpush1.msra.mxu0 %v950
    %1360 = vmatprep.subr.mxu0 %v947
    %1361 = vmatpush1.msra.mxu0 %v946
    %1362 = vmatprep.subr.mxu0 %v943
    %1363 = vmatpush1.msra.mxu0 %v942
    %1364 = vmatprep.subr.mxu0 %v939
    %1365 = vmatpush1.msra.mxu0 %v938
    %1366 = vmatprep.subr.mxu0 %v935
    %1367 = vmatpush1.msra.mxu0 %v934
    %1368 = vmatprep.subr.mxu0 %v931
    %1369 = vmatpush1.msra.mxu0 %v930
    %1370 = vmatprep.subr.mxu0 %v927
    %1371 = vmatpush1.msra.mxu0 %v926
    %1372 = vmatprep.subr.mxu0 %v923
    %1373 = vmatpush1.msra.mxu0 %v922
    %1374 = vmatprep.subr.mxu0 %v1047
    %1375 = vmatpush2.msra.mxu0 %v1046
    %1376 = vmatprep.subr.mxu0 %v1043
    %1377 = vmatpush2.msra.mxu0 %v1042
    %1378 = vmatprep.subr.mxu0 %v1039
    %1379 = vmatpush2.msra.mxu0 %v1038
    %1380 = vmatprep.subr.mxu0 %v1035
    %1381 = vmatpush2.msra.mxu0 %v1034
    %1382 = vmatprep.subr.mxu0 %v1031
    %1383 = vmatpush2.msra.mxu0 %v1030
    %1384 = vmatprep.subr.mxu0 %v1027
    %1385 = vmatpush2.msra.mxu0 %v1026
    %1386 = vmatprep.subr.mxu0 %v1023
    %1387 = vmatpush2.msra.mxu0 %v1022
    %1388 = vmatprep.subr.mxu0 %v1019
    %1389 = vmatpush2.msra.mxu0 %v1018
    %1390 = vmatprep.subr.mxu0 %v1015
    %1391 = vmatpush2.msra.mxu0 %v1014
    %1392 = vmatprep.subr.mxu0 %v1011
    %1393 = vmatpush2.msra.mxu0 %v1010
    %1394 = vmatprep.subr.mxu0 %v1007
    %1395 = vmatpush2.msra.mxu0 %v1006
    %1396 = vmatprep.subr.mxu0 %v1003
    %1397 = vmatpush2.msra.mxu0 %v1002
    %1398 = vmatprep.subr.mxu0 %v999
    %1399 = vmatpush2.msra.mxu0 %v998
    %1400 = vmatprep.subr.mxu0 %v995
    %1401 = vmatpush2.msra.mxu0 %v994
    %1402 = vmatprep.subr.mxu0 %v991
    %1403 = vmatpush2.msra.mxu0 %v990
    %1404 = vmatprep.subr.mxu0 %v987
    %1405 = vmatpush2.msra.mxu0 %v986
    %1406 = vmatprep.mubr.f32.mxu0 %v407
    %1407 = vmatmul.mubr.f32.gmra.mxu0 %v406
    %v1408 = vpop.f32.mrf.mxu0
    %v1409 = vadd.f32 %v1338, %v1408
    %v1410 = vpop.f32.mrf.mxu0
    %v1411 = vadd.f32 %v1340, %v1410
    %1412 = vdwg.mxu0
    %1413 = vmatprep.subr.mxu0 %v1111
    %1414 = vmatpush1.msra.mxu0 %v1110
    %1415 = vmatprep.subr.mxu0 %v1107
    %1416 = vmatpush1.msra.mxu0 %v1106
    %1417 = vmatprep.subr.mxu0 %v1103
    %1418 = vmatpush1.msra.mxu0 %v1102
    %1419 = vmatprep.subr.mxu0 %v1099
    %1420 = vmatpush1.msra.mxu0 %v1098
    %1421 = vmatprep.subr.mxu0 %v1095
    %1422 = vmatpush1.msra.mxu0 %v1094
    %1423 = vmatprep.subr.mxu0 %v1091
    %1424 = vmatpush1.msra.mxu0 %v1090
    %1425 = vmatprep.subr.mxu0 %v1087
    %1426 = vmatpush1.msra.mxu0 %v1086
    %1427 = vmatprep.subr.mxu0 %v1083
    %1428 = vmatpush1.msra.mxu0 %v1082
    %1429 = vmatprep.subr.mxu0 %v1079
    %1430 = vmatpush1.msra.mxu0 %v1078
    %1431 = vmatprep.subr.mxu0 %v1075
    %1432 = vmatpush1.msra.mxu0 %v1074
    %1433 = vmatprep.subr.mxu0 %v1071
    %1434 = vmatpush1.msra.mxu0 %v1070
    %1435 = vmatprep.subr.mxu0 %v1067
    %1436 = vmatpush1.msra.mxu0 %v1066
    %1437 = vmatprep.subr.mxu0 %v1063
    %1438 = vmatpush1.msra.mxu0 %v1062
    %1439 = vmatprep.subr.mxu0 %v1059
    %1440 = vmatpush1.msra.mxu0 %v1058
    %1441 = vmatprep.subr.mxu0 %v1055
    %1442 = vmatpush1.msra.mxu0 %v1054
    %1443 = vmatprep.subr.mxu0 %v1051
    %1444 = vmatpush1.msra.mxu0 %v1050
    %1445 = vmatprep.subr.mxu0 %v1175
    %1446 = vmatpush2.msra.mxu0 %v1174
    %1447 = vmatprep.subr.mxu0 %v1171
    %1448 = vmatpush2.msra.mxu0 %v1170
    %1449 = vmatprep.subr.mxu0 %v1167
    %1450 = vmatpush2.msra.mxu0 %v1166
    %1451 = vmatprep.subr.mxu0 %v1163
    %1452 = vmatpush2.msra.mxu0 %v1162
    %1453 = vmatprep.subr.mxu0 %v1159
    %1454 = vmatpush2.msra.mxu0 %v1158
    %1455 = vmatprep.subr.mxu0 %v1155
    %1456 = vmatpush2.msra.mxu0 %v1154
    %1457 = vmatprep.subr.mxu0 %v1151
    %1458 = vmatpush2.msra.mxu0 %v1150
    %1459 = vmatprep.subr.mxu0 %v1147
    %1460 = vmatpush2.msra.mxu0 %v1146
    %1461 = vmatprep.subr.mxu0 %v1143
    %1462 = vmatpush2.msra.mxu0 %v1142
    %1463 = vmatprep.subr.mxu0 %v1139
    %1464 = vmatpush2.msra.mxu0 %v1138
    %1465 = vmatprep.subr.mxu0 %v1135
    %1466 = vmatpush2.msra.mxu0 %v1134
    %1467 = vmatprep.subr.mxu0 %v1131
    %1468 = vmatpush2.msra.mxu0 %v1130
    %1469 = vmatprep.subr.mxu0 %v1127
    %1470 = vmatpush2.msra.mxu0 %v1126
    %1471 = vmatprep.subr.mxu0 %v1123
    %1472 = vmatpush2.msra.mxu0 %v1122
    %1473 = vmatprep.subr.mxu0 %v1119
    %1474 = vmatpush2.msra.mxu0 %v1118
    %1475 = vmatprep.subr.mxu0 %v1115
    %1476 = vmatpush2.msra.mxu0 %v1114
    %1477 = vmatprep.mubr.f32.mxu0 %v409
    %1478 = vmatmul.mubr.f32.gmra.mxu0 %v408
    %v1479 = vpop.f32.mrf.mxu0
    %v1480 = vadd.f32 %v1409, %v1479
    %v1481 = vpop.f32.mrf.mxu0
    %v1482 = vadd.f32 %v1411, %v1481
    %1483 = vdwg.mxu0
    %1484 = vmatprep.subr.mxu0 %v729
    %1485 = vmatpush1.msra.mxu0 %v728
    %1486 = vmatprep.subr.mxu0 %v725
    %1487 = vmatpush1.msra.mxu0 %v724
    %1488 = vmatprep.subr.mxu0 %v721
    %1489 = vmatpush1.msra.mxu0 %v720
    %1490 = vmatprep.subr.mxu0 %v717
    %1491 = vmatpush1.msra.mxu0 %v716
    %1492 = vmatprep.subr.mxu0 %v713
    %1493 = vmatpush1.msra.mxu0 %v712
    %1494 = vmatprep.subr.mxu0 %v709
    %1495 = vmatpush1.msra.mxu0 %v708
    %1496 = vmatprep.subr.mxu0 %v705
    %1497 = vmatpush1.msra.mxu0 %v704
    %1498 = vmatprep.subr.mxu0 %v701
    %1499 = vmatpush1.msra.mxu0 %v700
    %1500 = vmatprep.subr.mxu0 %v697
    %1501 = vmatpush1.msra.mxu0 %v696
    %1502 = vmatprep.subr.mxu0 %v693
    %1503 = vmatpush1.msra.mxu0 %v692
    %1504 = vmatprep.subr.mxu0 %v689
    %1505 = vmatpush1.msra.mxu0 %v688
    %1506 = vmatprep.subr.mxu0 %v685
    %1507 = vmatpush1.msra.mxu0 %v684
    %1508 = vmatprep.subr.mxu0 %v681
    %1509 = vmatpush1.msra.mxu0 %v680
    %1510 = vmatprep.subr.mxu0 %v677
    %1511 = vmatpush1.msra.mxu0 %v676
    %1512 = vmatprep.subr.mxu0 %v673
    %1513 = vmatpush1.msra.mxu0 %v672
    %1514 = vmatprep.subr.mxu0 %v669
    %1515 = vmatpush1.msra.mxu0 %v668
    %1516 = vmatprep.subr.mxu0 %v793
    %1517 = vmatpush2.msra.mxu0 %v792
    %1518 = vmatprep.subr.mxu0 %v789
    %1519 = vmatpush2.msra.mxu0 %v788
    %1520 = vmatprep.subr.mxu0 %v785
    %1521 = vmatpush2.msra.mxu0 %v784
    %1522 = vmatprep.subr.mxu0 %v781
    %1523 = vmatpush2.msra.mxu0 %v780
    %1524 = vmatprep.subr.mxu0 %v777
    %1525 = vmatpush2.msra.mxu0 %v776
    %1526 = vmatprep.subr.mxu0 %v773
    %1527 = vmatpush2.msra.mxu0 %v772
    %1528 = vmatprep.subr.mxu0 %v769
    %1529 = vmatpush2.msra.mxu0 %v768
    %1530 = vmatprep.subr.mxu0 %v765
    %1531 = vmatpush2.msra.mxu0 %v764
    %1532 = vmatprep.subr.mxu0 %v761
    %1533 = vmatpush2.msra.mxu0 %v760
    %1534 = vmatprep.subr.mxu0 %v757
    %1535 = vmatpush2.msra.mxu0 %v756
    %1536 = vmatprep.subr.mxu0 %v753
    %1537 = vmatpush2.msra.mxu0 %v752
    %1538 = vmatprep.subr.mxu0 %v749
    %1539 = vmatpush2.msra.mxu0 %v748
    %1540 = vmatprep.subr.mxu0 %v745
    %1541 = vmatpush2.msra.mxu0 %v744
    %1542 = vmatprep.subr.mxu0 %v741
    %1543 = vmatpush2.msra.mxu0 %v740
    %1544 = vmatprep.subr.mxu0 %v737
    %1545 = vmatpush2.msra.mxu0 %v736
    %1546 = vmatprep.subr.mxu0 %v733
    %1547 = vmatpush2.msra.mxu0 %v732
    %1548 = vmatprep.mubr.f32.mxu0 %v403
    %1549 = vmatmul.mubr.f32.gmra.mxu0 %v402
    %v1550 = vpop.f32.mrf.mxu0
    %v1551 = vadd.f32 %v1191, %v1550
    %v1552 = vpop.f32.mrf.mxu0
    %v1553 = vadd.f32 %v1195, %v1552
    %1554 = vdwg.mxu0
    %1555 = vmatprep.subr.mxu0 %v857
    %1556 = vmatpush1.msra.mxu0 %v856
    %1557 = vmatprep.subr.mxu0 %v853
    %1558 = vmatpush1.msra.mxu0 %v852
    %1559 = vmatprep.subr.mxu0 %v849
    %1560 = vmatpush1.msra.mxu0 %v848
    %1561 = vmatprep.subr.mxu0 %v845
    %1562 = vmatpush1.msra.mxu0 %v844
    %1563 = vmatprep.subr.mxu0 %v841
    %1564 = vmatpush1.msra.mxu0 %v840
    %1565 = vmatprep.subr.mxu0 %v837
    %1566 = vmatpush1.msra.mxu0 %v836
    %1567 = vmatprep.subr.mxu0 %v833
    %1568 = vmatpush1.msra.mxu0 %v832
    %1569 = vmatprep.subr.mxu0 %v829
    %1570 = vmatpush1.msra.mxu0 %v828
    %1571 = vmatprep.subr.mxu0 %v825
    %1572 = vmatpush1.msra.mxu0 %v824
    %1573 = vmatprep.subr.mxu0 %v821
    %1574 = vmatpush1.msra.mxu0 %v820
    %1575 = vmatprep.subr.mxu0 %v817
    %1576 = vmatpush1.msra.mxu0 %v816
    %1577 = vmatprep.subr.mxu0 %v813
    %1578 = vmatpush1.msra.mxu0 %v812
    %1579 = vmatprep.subr.mxu0 %v809
    %1580 = vmatpush1.msra.mxu0 %v808
    %1581 = vmatprep.subr.mxu0 %v805
    %1582 = vmatpush1.msra.mxu0 %v804
    %1583 = vmatprep.subr.mxu0 %v801
    %1584 = vmatpush1.msra.mxu0 %v800
    %1585 = vmatprep.subr.mxu0 %v797
    %1586 = vmatpush1.msra.mxu0 %v796
    %1587 = vmatprep.subr.mxu0 %v921
    %1588 = vmatpush2.msra.mxu0 %v920
    %1589 = vmatprep.subr.mxu0 %v917
    %1590 = vmatpush2.msra.mxu0 %v916
    %1591 = vmatprep.subr.mxu0 %v913
    %1592 = vmatpush2.msra.mxu0 %v912
    %1593 = vmatprep.subr.mxu0 %v909
    %1594 = vmatpush2.msra.mxu0 %v908
    %1595 = vmatprep.subr.mxu0 %v905
    %1596 = vmatpush2.msra.mxu0 %v904
    %1597 = vmatprep.subr.mxu0 %v901
    %1598 = vmatpush2.msra.mxu0 %v900
    %1599 = vmatprep.subr.mxu0 %v897
    %1600 = vmatpush2.msra.mxu0 %v896
    %1601 = vmatprep.subr.mxu0 %v893
    %1602 = vmatpush2.msra.mxu0 %v892
    %1603 = vmatprep.subr.mxu0 %v889
    %1604 = vmatpush2.msra.mxu0 %v888
    %1605 = vmatprep.subr.mxu0 %v885
    %1606 = vmatpush2.msra.mxu0 %v884
    %1607 = vmatprep.subr.mxu0 %v881
    %1608 = vmatpush2.msra.mxu0 %v880
    %1609 = vmatprep.subr.mxu0 %v877
    %1610 = vmatpush2.msra.mxu0 %v876
    %1611 = vmatprep.subr.mxu0 %v873
    %1612 = vmatpush2.msra.mxu0 %v872
    %1613 = vmatprep.subr.mxu0 %v869
    %1614 = vmatpush2.msra.mxu0 %v868
    %1615 = vmatprep.subr.mxu0 %v865
    %1616 = vmatpush2.msra.mxu0 %v864
    %1617 = vmatprep.subr.mxu0 %v861
    %1618 = vmatpush2.msra.mxu0 %v860
    %1619 = vmatprep.mubr.f32.mxu0 %v405
    %1620 = vmatmul.mubr.f32.gmra.mxu0 %v404
    %v1621 = vpop.f32.mrf.mxu0
    %v1622 = vadd.f32 %v1551, %v1621
    %v1623 = vpop.f32.mrf.mxu0
    %v1624 = vadd.f32 %v1553, %v1623
    %1625 = vdwg.mxu0
    %1626 = vmatprep.subr.mxu0 %v985
    %1627 = vmatpush1.msra.mxu0 %v984
    %1628 = vmatprep.subr.mxu0 %v981
    %1629 = vmatpush1.msra.mxu0 %v980
    %1630 = vmatprep.subr.mxu0 %v977
    %1631 = vmatpush1.msra.mxu0 %v976
    %1632 = vmatprep.subr.mxu0 %v973
    %1633 = vmatpush1.msra.mxu0 %v972
    %1634 = vmatprep.subr.mxu0 %v969
    %1635 = vmatpush1.msra.mxu0 %v968
    %1636 = vmatprep.subr.mxu0 %v965
    %1637 = vmatpush1.msra.mxu0 %v964
    %1638 = vmatprep.subr.mxu0 %v961
    %1639 = vmatpush1.msra.mxu0 %v960
    %1640 = vmatprep.subr.mxu0 %v957
    %1641 = vmatpush1.msra.mxu0 %v956
    %1642 = vmatprep.subr.mxu0 %v953
    %1643 = vmatpush1.msra.mxu0 %v952
    %1644 = vmatprep.subr.mxu0 %v949
    %1645 = vmatpush1.msra.mxu0 %v948
    %1646 = vmatprep.subr.mxu0 %v945
    %1647 = vmatpush1.msra.mxu0 %v944
    %1648 = vmatprep.subr.mxu0 %v941
    %1649 = vmatpush1.msra.mxu0 %v940
    %1650 = vmatprep.subr.mxu0 %v937
    %1651 = vmatpush1.msra.mxu0 %v936
    %1652 = vmatprep.subr.mxu0 %v933
    %1653 = vmatpush1.msra.mxu0 %v932
    %1654 = vmatprep.subr.mxu0 %v929
    %1655 = vmatpush1.msra.mxu0 %v928
    %1656 = vmatprep.subr.mxu0 %v925
    %1657 = vmatpush1.msra.mxu0 %v924
    %1658 = vmatprep.subr.mxu0 %v1049
    %1659 = vmatpush2.msra.mxu0 %v1048
    %1660 = vmatprep.subr.mxu0 %v1045
    %1661 = vmatpush2.msra.mxu0 %v1044
    %1662 = vmatprep.subr.mxu0 %v1041
    %1663 = vmatpush2.msra.mxu0 %v1040
    %1664 = vmatprep.subr.mxu0 %v1037
    %1665 = vmatpush2.msra.mxu0 %v1036
    %1666 = vmatprep.subr.mxu0 %v1033
    %1667 = vmatpush2.msra.mxu0 %v1032
    %1668 = vmatprep.subr.mxu0 %v1029
    %1669 = vmatpush2.msra.mxu0 %v1028
    %1670 = vmatprep.subr.mxu0 %v1025
    %1671 = vmatpush2.msra.mxu0 %v1024
    %1672 = vmatprep.subr.mxu0 %v1021
    %1673 = vmatpush2.msra.mxu0 %v1020
    %1674 = vmatprep.subr.mxu0 %v1017
    %1675 = vmatpush2.msra.mxu0 %v1016
    %1676 = vmatprep.subr.mxu0 %v1013
    %1677 = vmatpush2.msra.mxu0 %v1012
    %1678 = vmatprep.subr.mxu0 %v1009
    %1679 = vmatpush2.msra.mxu0 %v1008
    %1680 = vmatprep.subr.mxu0 %v1005
    %1681 = vmatpush2.msra.mxu0 %v1004
    %1682 = vmatprep.subr.mxu0 %v1001
    %1683 = vmatpush2.msra.mxu0 %v1000
    %1684 = vmatprep.subr.mxu0 %v997
    %1685 = vmatpush2.msra.mxu0 %v996
    %1686 = vmatprep.subr.mxu0 %v993
    %1687 = vmatpush2.msra.mxu0 %v992
    %1688 = vmatprep.subr.mxu0 %v989
    %1689 = vmatpush2.msra.mxu0 %v988
    %1690 = vmatprep.mubr.f32.mxu0 %v407
    %1691 = vmatmul.mubr.f32.gmra.mxu0 %v406
    %v1692 = vpop.f32.mrf.mxu0
    %v1693 = vadd.f32 %v1622, %v1692
    %v1694 = vpop.f32.mrf.mxu0
    %v1695 = vadd.f32 %v1624, %v1694
    %1696 = vdwg.mxu0
    %1697 = vmatprep.subr.mxu0 %v1113
    %1698 = vmatpush1.msra.mxu0 %v1112
    %1699 = vmatprep.subr.mxu0 %v1109
    %1700 = vmatpush1.msra.mxu0 %v1108
    %1701 = vmatprep.subr.mxu0 %v1105
    %1702 = vmatpush1.msra.mxu0 %v1104
    %1703 = vmatprep.subr.mxu0 %v1101
    %1704 = vmatpush1.msra.mxu0 %v1100
    %1705 = vmatprep.subr.mxu0 %v1097
    %1706 = vmatpush1.msra.mxu0 %v1096
    %1707 = vmatprep.subr.mxu0 %v1093
    %1708 = vmatpush1.msra.mxu0 %v1092
    %1709 = vmatprep.subr.mxu0 %v1089
    %1710 = vmatpush1.msra.mxu0 %v1088
    %1711 = vmatprep.subr.mxu0 %v1085
    %1712 = vmatpush1.msra.mxu0 %v1084
    %1713 = vmatprep.subr.mxu0 %v1081
    %1714 = vmatpush1.msra.mxu0 %v1080
    %1715 = vmatprep.subr.mxu0 %v1077
    %1716 = vmatpush1.msra.mxu0 %v1076
    %1717 = vmatprep.subr.mxu0 %v1073
    %1718 = vmatpush1.msra.mxu0 %v1072
    %1719 = vmatprep.subr.mxu0 %v1069
    %1720 = vmatpush1.msra.mxu0 %v1068
    %1721 = vmatprep.subr.mxu0 %v1065
    %1722 = vmatpush1.msra.mxu0 %v1064
    %1723 = vmatprep.subr.mxu0 %v1061
    %1724 = vmatpush1.msra.mxu0 %v1060
    %1725 = vmatprep.subr.mxu0 %v1057
    %1726 = vmatpush1.msra.mxu0 %v1056
    %1727 = vmatprep.subr.mxu0 %v1053
    %1728 = vmatpush1.msra.mxu0 %v1052
    %1729 = vmatprep.subr.mxu0 %v1177
    %1730 = vmatpush2.msra.mxu0 %v1176
    %1731 = vmatprep.subr.mxu0 %v1173
    %1732 = vmatpush2.msra.mxu0 %v1172
    %1733 = vmatprep.subr.mxu0 %v1169
    %1734 = vmatpush2.msra.mxu0 %v1168
    %1735 = vmatprep.subr.mxu0 %v1165
    %1736 = vmatpush2.msra.mxu0 %v1164
    %1737 = vmatprep.subr.mxu0 %v1161
    %1738 = vmatpush2.msra.mxu0 %v1160
    %1739 = vmatprep.subr.mxu0 %v1157
    %1740 = vmatpush2.msra.mxu0 %v1156
    %1741 = vmatprep.subr.mxu0 %v1153
    %1742 = vmatpush2.msra.mxu0 %v1152
    %1743 = vmatprep.subr.mxu0 %v1149
    %1744 = vmatpush2.msra.mxu0 %v1148
    %1745 = vmatprep.subr.mxu0 %v1145
    %1746 = vmatpush2.msra.mxu0 %v1144
    %1747 = vmatprep.subr.mxu0 %v1141
    %1748 = vmatpush2.msra.mxu0 %v1140
    %1749 = vmatprep.subr.mxu0 %v1137
    %1750 = vmatpush2.msra.mxu0 %v1136
    %1751 = vmatprep.subr.mxu0 %v1133
    %1752 = vmatpush2.msra.mxu0 %v1132
    %1753 = vmatprep.subr.mxu0 %v1129
    %1754 = vmatpush2.msra.mxu0 %v1128
    %1755 = vmatprep.subr.mxu0 %v1125
    %1756 = vmatpush2.msra.mxu0 %v1124
    %1757 = vmatprep.subr.mxu0 %v1121
    %1758 = vmatpush2.msra.mxu0 %v1120
    %1759 = vmatprep.subr.mxu0 %v1117
    %1760 = vmatpush2.msra.mxu0 %v1116
    %1761 = vmatprep.mubr.f32.mxu0 %v409
    %1762 = vmatmul.mubr.f32.gmra.mxu0 %v408
    %v1763 = vpop.f32.mrf.mxu0
    %v1764 = vadd.f32 %v1693, %v1763
    %v1765 = vpop.f32.mrf.mxu0
    %v1766 = vadd.f32 %v1695, %v1765
    %1767 = vdwg.mxu0
    %v1768 = vmax.f32 %v1480, 0.0
    %v1769 = vmax.f32 %v1482, 0.0
    %v1770 = vmax.f32 %v1764, 0.0
    %v1771 = vmax.f32 %v1766, 0.0
    %v1772 = vld [vmem:[%s5] sm:$0xf]
    %v1773 = vld [vmem:[%s5 + $0x4] sm:$0xf]
    %v1774 = vld [vmem:[%s5 + $0x8] sm:$0xf]
    %v1775 = vld [vmem:[%s5 + $0xc] sm:$0xf]
    %v1776 = vld [vmem:[%s5 + $0x10] sm:$0xf]
    %v1777 = vld [vmem:[%s5 + $0x14] sm:$0xf]
    %v1778 = vld [vmem:[%s5 + $0x18] sm:$0xf]
    %v1779 = vld [vmem:[%s5 + $0x1c] sm:$0xf]
    %v1780 = vld [vmem:[%s5 + $0x20] sm:$0xf]
    %v1781 = vld [vmem:[%s5 + $0x24] sm:$0xf]
    %v1782 = vld [vmem:[%s5 + $0x28] sm:$0xf]
    %v1783 = vld [vmem:[%s5 + $0x2c] sm:$0xf]
    %v1784 = vld [vmem:[%s5 + $0x30] sm:$0xf]
    %v1785 = vld [vmem:[%s5 + $0x34] sm:$0xf]
    %v1786 = vld [vmem:[%s5 + $0x38] sm:$0xf]
    %v1787 = vld [vmem:[%s5 + $0x3c] sm:$0xf]
    %v1788 = vld [vmem:[%s5 + $0x40] sm:$0xf]
    %v1789 = vld [vmem:[%s5 + $0x44] sm:$0xf]
    %v1790 = vld [vmem:[%s5 + $0x48] sm:$0xf]
    %v1791 = vld [vmem:[%s5 + $0x4c] sm:$0xf]
    %v1792 = vld [vmem:[%s5 + $0x50] sm:$0xf]
    %v1793 = vld [vmem:[%s5 + $0x54] sm:$0xf]
    %v1794 = vld [vmem:[%s5 + $0x58] sm:$0xf]
    %v1795 = vld [vmem:[%s5 + $0x5c] sm:$0xf]
    %v1796 = vld [vmem:[%s5 + $0x60] sm:$0xf]
    %v1797 = vld [vmem:[%s5 + $0x64] sm:$0xf]
    %v1798 = vld [vmem:[%s5 + $0x68] sm:$0xf]
    %v1799 = vld [vmem:[%s5 + $0x6c] sm:$0xf]
    %v1800 = vld [vmem:[%s5 + $0x70] sm:$0xf]
    %v1801 = vld [vmem:[%s5 + $0x74] sm:$0xf]
    %v1802 = vld [vmem:[%s5 + $0x78] sm:$0xf]
    %v1803 = vld [vmem:[%s5 + $0x7c] sm:$0xf]
    %v1804 = vld [vmem:[%s5 + $0x80] sm:$0xf]
    %v1805 = vld [vmem:[%s5 + $0x84] sm:$0xf]
    %v1806 = vld [vmem:[%s5 + $0x88] sm:$0xf]
    %v1807 = vld [vmem:[%s5 + $0x8c] sm:$0xf]
    %v1808 = vld [vmem:[%s5 + $0x90] sm:$0xf]
    %v1809 = vld [vmem:[%s5 + $0x94] sm:$0xf]
    %v1810 = vld [vmem:[%s5 + $0x98] sm:$0xf]
    %v1811 = vld [vmem:[%s5 + $0x9c] sm:$0xf]
    %v1812 = vld [vmem:[%s5 + $0xa0] sm:$0xf]
    %v1813 = vld [vmem:[%s5 + $0xa4] sm:$0xf]
    %v1814 = vld [vmem:[%s5 + $0xa8] sm:$0xf]
    %v1815 = vld [vmem:[%s5 + $0xac] sm:$0xf]
    %v1816 = vld [vmem:[%s5 + $0xb0] sm:$0xf]
    %v1817 = vld [vmem:[%s5 + $0xb4] sm:$0xf]
    %v1818 = vld [vmem:[%s5 + $0xb8] sm:$0xf]
    %v1819 = vld [vmem:[%s5 + $0xbc] sm:$0xf]
    %v1820 = vld [vmem:[%s5 + $0xc0] sm:$0xf]
    %v1821 = vld [vmem:[%s5 + $0xc4] sm:$0xf]
    %v1822 = vld [vmem:[%s5 + $0xc8] sm:$0xf]
    %v1823 = vld [vmem:[%s5 + $0xcc] sm:$0xf]
    %v1824 = vld [vmem:[%s5 + $0xd0] sm:$0xf]
    %v1825 = vld [vmem:[%s5 + $0xd4] sm:$0xf]
    %v1826 = vld [vmem:[%s5 + $0xd8] sm:$0xf]
    %v1827 = vld [vmem:[%s5 + $0xdc] sm:$0xf]
    %v1828 = vld [vmem:[%s5 + $0xe0] sm:$0xf]
    %v1829 = vld [vmem:[%s5 + $0xe4] sm:$0xf]
    %v1830 = vld [vmem:[%s5 + $0xe8] sm:$0xf]
    %v1831 = vld [vmem:[%s5 + $0xec] sm:$0xf]
    %v1832 = vld [vmem:[%s5 + $0xf0] sm:$0xf]
    %v1833 = vld [vmem:[%s5 + $0xf4] sm:$0xf]
    %v1834 = vld [vmem:[%s5 + $0xf8] sm:$0xf]
    %v1835 = vld [vmem:[%s5 + $0xfc] sm:$0xf]
    %v1836 = vunpack.c.l.bf16 %v1772
    %v1837 = vunpack.c.l.bf16 %v1773
    %v1838 = vunpack.c.l.bf16 %v1774
    %v1839 = vunpack.c.l.bf16 %v1775
    %v1840 = vunpack.c.l.bf16 %v1776
    %v1841 = vunpack.c.l.bf16 %v1777
    %v1842 = vunpack.c.l.bf16 %v1778
    %v1843 = vunpack.c.l.bf16 %v1779
    %v1844 = vunpack.c.l.bf16 %v1780
    %v1845 = vunpack.c.l.bf16 %v1781
    %v1846 = vunpack.c.l.bf16 %v1782
    %v1847 = vunpack.c.l.bf16 %v1783
    %v1848 = vunpack.c.l.bf16 %v1784
    %v1849 = vunpack.c.l.bf16 %v1785
    %v1850 = vunpack.c.l.bf16 %v1786
    %v1851 = vunpack.c.l.bf16 %v1787
    %v1852 = vunpack.c.l.bf16 %v1788
    %v1853 = vunpack.c.l.bf16 %v1789
    %v1854 = vunpack.c.l.bf16 %v1790
    %v1855 = vunpack.c.l.bf16 %v1791
    %v1856 = vunpack.c.l.bf16 %v1792
    %v1857 = vunpack.c.l.bf16 %v1793
    %v1858 = vunpack.c.l.bf16 %v1794
    %v1859 = vunpack.c.l.bf16 %v1795
    %v1860 = vunpack.c.l.bf16 %v1796
    %v1861 = vunpack.c.l.bf16 %v1797
    %v1862 = vunpack.c.l.bf16 %v1798
    %v1863 = vunpack.c.l.bf16 %v1799
    %v1864 = vunpack.c.l.bf16 %v1800
    %v1865 = vunpack.c.l.bf16 %v1801
    %v1866 = vunpack.c.l.bf16 %v1802
    %v1867 = vunpack.c.l.bf16 %v1803
    %v1868 = vunpack.c.l.bf16 %v1804
    %v1869 = vunpack.c.l.bf16 %v1805
    %v1870 = vunpack.c.l.bf16 %v1806
    %v1871 = vunpack.c.l.bf16 %v1807
    %v1872 = vunpack.c.l.bf16 %v1808
    %v1873 = vunpack.c.l.bf16 %v1809
    %v1874 = vunpack.c.l.bf16 %v1810
    %v1875 = vunpack.c.l.bf16 %v1811
    %v1876 = vunpack.c.l.bf16 %v1812
    %v1877 = vunpack.c.l.bf16 %v1813
    %v1878 = vunpack.c.l.bf16 %v1814
    %v1879 = vunpack.c.l.bf16 %v1815
    %v1880 = vunpack.c.l.bf16 %v1816
    %v1881 = vunpack.c.l.bf16 %v1817
    %v1882 = vunpack.c.l.bf16 %v1818
    %v1883 = vunpack.c.l.bf16 %v1819
    %v1884 = vunpack.c.l.bf16 %v1820
    %v1885 = vunpack.c.l.bf16 %v1821
    %v1886 = vunpack.c.l.bf16 %v1822
    %v1887 = vunpack.c.l.bf16 %v1823
    %v1888 = vunpack.c.l.bf16 %v1824
    %v1889 = vunpack.c.l.bf16 %v1825
    %v1890 = vunpack.c.l.bf16 %v1826
    %v1891 = vunpack.c.l.bf16 %v1827
    %v1892 = vunpack.c.l.bf16 %v1828
    %v1893 = vunpack.c.l.bf16 %v1829
    %v1894 = vunpack.c.l.bf16 %v1830
    %v1895 = vunpack.c.l.bf16 %v1831
    %v1896 = vunpack.c.l.bf16 %v1832
    %v1897 = vunpack.c.l.bf16 %v1833
    %v1898 = vunpack.c.l.bf16 %v1834
    %v1899 = vunpack.c.l.bf16 %v1835
    %v1900 = vld [vmem:[%s6] sm:$0x1]
    %v1902 = vlaneseq
    %v1903 = vshrl.u32 %v1902, 7
    %v1904 = vsub.s32 0, %v1903
    %v1905 = vrot.slane %v1900, %v1904
    %1907 = vmatprep.subr.mxu0 0.0
    %1908 = vmatpush1.msra.mxu0 %v1851
    %1909 = vmatprep.subr.mxu0 0.0
    %1910 = vmatpush1.msra.mxu0 %v1850
    %1911 = vmatprep.subr.mxu0 0.0
    %1912 = vmatpush1.msra.mxu0 %v1849
    %1913 = vmatprep.subr.mxu0 0.0
    %1914 = vmatpush1.msra.mxu0 %v1848
    %1915 = vmatprep.subr.mxu0 0.0
    %1916 = vmatpush1.msra.mxu0 %v1847
    %1917 = vmatprep.subr.mxu0 0.0
    %1918 = vmatpush1.msra.mxu0 %v1846
    %1919 = vmatprep.subr.mxu0 0.0
    %1920 = vmatpush1.msra.mxu0 %v1845
    %1921 = vmatprep.subr.mxu0 0.0
    %1922 = vmatpush1.msra.mxu0 %v1844
    %1923 = vmatprep.subr.mxu0 0.0
    %1924 = vmatpush1.msra.mxu0 %v1843
    %1925 = vmatprep.subr.mxu0 0.0
    %1926 = vmatpush1.msra.mxu0 %v1842
    %1927 = vmatprep.subr.mxu0 0.0
    %1928 = vmatpush1.msra.mxu0 %v1841
    %1929 = vmatprep.subr.mxu0 0.0
    %1930 = vmatpush1.msra.mxu0 %v1840
    %1931 = vmatprep.subr.mxu0 0.0
    %1932 = vmatpush1.msra.mxu0 %v1839
    %1933 = vmatprep.subr.mxu0 0.0
    %1934 = vmatpush1.msra.mxu0 %v1838
    %1935 = vmatprep.subr.mxu0 0.0
    %1936 = vmatpush1.msra.mxu0 %v1837
    %1937 = vmatprep.subr.mxu0 0.0
    %1938 = vmatpush1.msra.mxu0 %v1836
    %1939 = vmatprep.subr.mxu0 0.0
    %1940 = vmatpush2.msra.mxu0 %v1867
    %1941 = vmatprep.subr.mxu0 0.0
    %1942 = vmatpush2.msra.mxu0 %v1866
    %1943 = vmatprep.subr.mxu0 0.0
    %1944 = vmatpush2.msra.mxu0 %v1865
    %1945 = vmatprep.subr.mxu0 0.0
    %1946 = vmatpush2.msra.mxu0 %v1864
    %1947 = vmatprep.subr.mxu0 0.0
    %1948 = vmatpush2.msra.mxu0 %v1863
    %1949 = vmatprep.subr.mxu0 0.0
    %1950 = vmatpush2.msra.mxu0 %v1862
    %1951 = vmatprep.subr.mxu0 0.0
    %1952 = vmatpush2.msra.mxu0 %v1861
    %1953 = vmatprep.subr.mxu0 0.0
    %1954 = vmatpush2.msra.mxu0 %v1860
    %1955 = vmatprep.subr.mxu0 0.0
    %1956 = vmatpush2.msra.mxu0 %v1859
    %1957 = vmatprep.subr.mxu0 0.0
    %1958 = vmatpush2.msra.mxu0 %v1858
    %1959 = vmatprep.subr.mxu0 0.0
    %1960 = vmatpush2.msra.mxu0 %v1857
    %1961 = vmatprep.subr.mxu0 0.0
    %1962 = vmatpush2.msra.mxu0 %v1856
    %1963 = vmatprep.subr.mxu0 0.0
    %1964 = vmatpush2.msra.mxu0 %v1855
    %1965 = vmatprep.subr.mxu0 0.0
    %1966 = vmatpush2.msra.mxu0 %v1854
    %1967 = vmatprep.subr.mxu0 0.0
    %1968 = vmatpush2.msra.mxu0 %v1853
    %1969 = vmatprep.subr.mxu0 0.0
    %1970 = vmatpush2.msra.mxu0 %v1852
    %1971 = vmatprep.mubr.f32.mxu0 %v1769
    %1972 = vmatmul.mubr.f32.gmra.mxu0 %v1768
    %v1973 = vpop.f32.mrf.mxu0
    %v1974 = vadd.f32 %v1905, %v1973
    %v1975 = vpop.f32.mrf.mxu0
    %1976 = vdwg.mxu0
    %1977 = vmatprep.subr.mxu0 0.0
    %1978 = vmatpush1.msra.mxu0 %v1883
    %1979 = vmatprep.subr.mxu0 0.0
    %1980 = vmatpush1.msra.mxu0 %v1882
    %1981 = vmatprep.subr.mxu0 0.0
    %1982 = vmatpush1.msra.mxu0 %v1881
    %1983 = vmatprep.subr.mxu0 0.0
    %1984 = vmatpush1.msra.mxu0 %v1880
    %1985 = vmatprep.subr.mxu0 0.0
    %1986 = vmatpush1.msra.mxu0 %v1879
    %1987 = vmatprep.subr.mxu0 0.0
    %1988 = vmatpush1.msra.mxu0 %v1878
    %1989 = vmatprep.subr.mxu0 0.0
    %1990 = vmatpush1.msra.mxu0 %v1877
    %1991 = vmatprep.subr.mxu0 0.0
    %1992 = vmatpush1.msra.mxu0 %v1876
    %1993 = vmatprep.subr.mxu0 0.0
    %1994 = vmatpush1.msra.mxu0 %v1875
    %1995 = vmatprep.subr.mxu0 0.0
    %1996 = vmatpush1.msra.mxu0 %v1874
    %1997 = vmatprep.subr.mxu0 0.0
    %1998 = vmatpush1.msra.mxu0 %v1873
    %1999 = vmatprep.subr.mxu0 0.0
    %2000 = vmatpush1.msra.mxu0 %v1872
    %2001 = vmatprep.subr.mxu0 0.0
    %2002 = vmatpush1.msra.mxu0 %v1871
    %2003 = vmatprep.subr.mxu0 0.0
    %2004 = vmatpush1.msra.mxu0 %v1870
    %2005 = vmatprep.subr.mxu0 0.0
    %2006 = vmatpush1.msra.mxu0 %v1869
    %2007 = vmatprep.subr.mxu0 0.0
    %2008 = vmatpush1.msra.mxu0 %v1868
    %2009 = vmatprep.subr.mxu0 0.0
    %2010 = vmatpush2.msra.mxu0 %v1899
    %2011 = vmatprep.subr.mxu0 0.0
    %2012 = vmatpush2.msra.mxu0 %v1898
    %2013 = vmatprep.subr.mxu0 0.0
    %2014 = vmatpush2.msra.mxu0 %v1897
    %2015 = vmatprep.subr.mxu0 0.0
    %2016 = vmatpush2.msra.mxu0 %v1896
    %2017 = vmatprep.subr.mxu0 0.0
    %2018 = vmatpush2.msra.mxu0 %v1895
    %2019 = vmatprep.subr.mxu0 0.0
    %2020 = vmatpush2.msra.mxu0 %v1894
    %2021 = vmatprep.subr.mxu0 0.0
    %2022 = vmatpush2.msra.mxu0 %v1893
    %2023 = vmatprep.subr.mxu0 0.0
    %2024 = vmatpush2.msra.mxu0 %v1892
    %2025 = vmatprep.subr.mxu0 0.0
    %2026 = vmatpush2.msra.mxu0 %v1891
    %2027 = vmatprep.subr.mxu0 0.0
    %2028 = vmatpush2.msra.mxu0 %v1890
    %2029 = vmatprep.subr.mxu0 0.0
    %2030 = vmatpush2.msra.mxu0 %v1889
    %2031 = vmatprep.subr.mxu0 0.0
    %2032 = vmatpush2.msra.mxu0 %v1888
    %2033 = vmatprep.subr.mxu0 0.0
    %2034 = vmatpush2.msra.mxu0 %v1887
    %2035 = vmatprep.subr.mxu0 0.0
    %2036 = vmatpush2.msra.mxu0 %v1886
    %2037 = vmatprep.subr.mxu0 0.0
    %2038 = vmatpush2.msra.mxu0 %v1885
    %2039 = vmatprep.subr.mxu0 0.0
    %2040 = vmatpush2.msra.mxu0 %v1884
    %2041 = vmatprep.mubr.f32.mxu0 %v1771
    %2042 = vmatmul.mubr.f32.gmra.mxu0 %v1770
    %v2043 = vpop.f32.mrf.mxu0
    %v2044 = vadd.f32 %v1974, %v2043
    %v2045 = vpop.f32.mrf.mxu0
    %2046 = vdwg.mxu0
    %vm2047 = vcmask 15360
    %v2048 = vsel %vm2047, %v2044, -inf
    %2049 = vmax.xlane.f32.xlu0 %v2048
    %v2050 = vpop.xlane.xlu0 %2049
    %v2051 = vsub.f32 %v2044, %v2050
    %v2052 = vmul.f32 %v2051, 1.442695
    %v2053 = vpow.pop %v2052
    %v2054 = vsel %vm2047, %v2053, 0.0
    %2055 = vadd.xlane.f32.xlu0 %v2054
    %v2056 = vpop.xlane.xlu0 %2055
    %v2057 = vrcp.pop %v2056
    %v2058 = vmul.f32 %v2053, %v2057
    %2059 = vst.msk [vmem:[%s7] sm:$0xff] %vm2047, %v2058
    // Predicated region
    $region34: #{tpu_custom_call.1} parent=1 // pred_check
      _
    $region35: #{tpu_custom_call.1} parent=1 // pred_check_branch
      %2061 = sbr.rel (0) target = $region37
    $region36: #{tpu_custom_call.1} parent=1 // pred_region
      _
    $region37: #{tpu_custom_call.1} parent=1 // pred_fallthru
      _
    // Predicated region
    $region38: #{tpu_custom_call.1} parent=1 // pred_check
      _
    $region39: #{tpu_custom_call.1} parent=1 // pred_check_branch
      %2063 = sbr.rel (0) target = $region41
    $region40: #{tpu_custom_call.1} parent=1 // pred_region
      _
    $region41: #{tpu_custom_call.1} parent=1 // pred_fallthru
      _
    %2064 = vsyncpa [#allocation3], 1

</llo_original>
